<compile_context>
chip_gen: v7x
topology: tpu7x:2x2x1
jax: 0.10.0
libtpu: 0.0.40
codegen_flags: <defaults>
</compile_context>

<pallas_src>
import functools

import jax
import jax.numpy as jnp
from jax.experimental import pallas as pl
from jax.experimental.pallas import tpu as pltpu


def mf_kernel(u_ref, i_ref, o_ref):
    # u_ref, i_ref : [tb, D] tiles in the tables' storage dtype.
    # o_ref        : [tb // 128, 128] f32 lane-dense output tile.
    u = u_ref[...].astype(jnp.float32)
    i = i_ref[...].astype(jnp.float32)
    s = jnp.sum(u * i, axis=-1)              # [tb] per-row dot products (f32)
    o_ref[...] = s.reshape(o_ref.shape)      # lane-dense (tb//128, 128) store


@functools.partial(jax.jit, static_argnames=("tb",))
def mf_forward(user_table, item_table, user_idx, item_idx, *, tb=2048):
    """MF forward: (user_embed[user] * item_embed[items]).sum(1) -> [B]."""
    assert user_table.shape[1] == item_table.shape[1]
    D = user_table.shape[1]
    B = user_idx.shape[0]
    # tb multiple of 1024 keeps the output block an (8,128)-aligned slab.
    assert tb % 1024 == 0

    # Pad the *index* vectors (cheap) so the batch is a whole number of tiles.
    b_pad = tb * pl.cdiv(B, tb)
    if b_pad != B:
        user_idx = jnp.pad(user_idx, (0, b_pad - B))
        item_idx = jnp.pad(item_idx, (0, b_pad - B))

    # Row gather in storage dtype (no wrapper-side f32 upcast / extra HBM copy).
    u_emb = jnp.take(user_table, user_idx, axis=0)     # [b_pad, D]
    i_emb = jnp.take(item_table, item_idx, axis=0)     # [b_pad, D]

    n_tiles = b_pad // tb
    rows_per_tile = tb // 128

    out2d = pl.pallas_call(
        mf_kernel,
        out_shape=jax.ShapeDtypeStruct((b_pad // 128, 128), jnp.float32),
        grid_spec=pltpu.PrefetchScalarGridSpec(
            num_scalar_prefetch=0,
            grid=(n_tiles,),
            in_specs=[
                pl.BlockSpec((tb, D), lambda t: (t, 0)),
                pl.BlockSpec((tb, D), lambda t: (t, 0)),
            ],
            out_specs=pl.BlockSpec((rows_per_tile, 128), lambda t: (t, 0)),
        ),
        compiler_params=pltpu.CompilerParams(
            dimension_semantics=("parallel",),
        ),
    )(u_emb, i_emb)

    out = out2d.reshape(b_pad)[:B]                     # [B] f32
    return out.astype(jnp.promote_types(user_table.dtype, item_table.dtype))


if __name__ == "__main__":
    # Small, deterministic setup consistent with MF(users, items, latent_dim).
    users, items, latent_dim = 10, 20, 128
    batch = 8

    key = jax.random.PRNGKey(0)
    k_u, k_i, k_ui, k_ii = jax.random.split(key, 4)

    # nn.Embedding default init ~ N(0, 1)
    user_table = jax.random.normal(k_u, (users, latent_dim), dtype=jnp.float32)
    item_table = jax.random.normal(k_i, (items, latent_dim), dtype=jnp.float32)

    user_idx = jax.random.randint(k_ui, (batch,), 0, users, dtype=jnp.int32)
    item_idx = jax.random.randint(k_ii, (batch,), 0, items, dtype=jnp.int32)

    out = mf_forward(user_table, item_table, user_idx, item_idx)
    out = jax.block_until_ready(out)

    # Pure-JAX reference check of the forward semantics.
    ref = jnp.sum(user_table[user_idx] * item_table[item_idx], axis=1)
    assert out.shape == (batch,)
    assert jnp.allclose(out, ref, atol=1e-5, rtol=1e-5)

    print("KERNEL_OK")
</pallas_src>

<mosaic_0001>
module attributes {stable_mosaic.version = 11 : i64} {
  func.func @mf_kernel(%arg0: i32, %arg1: memref<2048x128xf32, #tpu.memory_space<vmem>>, %arg2: memref<2048x128xf32, #tpu.memory_space<vmem>>, %arg3: memref<16x128xf32, #tpu.memory_space<vmem>>) attributes {dimension_semantics = [#tpu.dimension_semantics<parallel>], iteration_bounds = array<i64: 1>, scalar_prefetch = 0 : i64, scratch_operands = 0 : i64, tpu.core_type = #tpu.core_type<tc>, window_params = [{transform_indices = @transform_0, window_bounds = array<i64: 2048, 128>}, {transform_indices = @transform_1, window_bounds = array<i64: 2048, 128>}, {transform_indices = @transform_2, window_bounds = array<i64: 16, 128>}]} {
    %c0 = arith.constant 0 : index
    %c0_0 = arith.constant 0 : index
    %0 = vector.load %arg1[%c0, %c0_0] : memref<2048x128xf32, #tpu.memory_space<vmem>>, vector<2048x128xf32>
    %c0_1 = arith.constant 0 : index
    %c0_2 = arith.constant 0 : index
    %1 = vector.load %arg2[%c0_1, %c0_2] : memref<2048x128xf32, #tpu.memory_space<vmem>>, vector<2048x128xf32>
    %2 = arith.mulf %0, %1 : vector<2048x128xf32>
    %cst = arith.constant dense<0.000000e+00> : vector<2048xf32>
    %3 = vector.multi_reduction <add>, %2, %cst [1] : vector<2048x128xf32> to vector<2048xf32>
    %4 = vector.shape_cast %3 : vector<2048xf32> to vector<16x128xf32>
    %c0_3 = arith.constant 0 : index
    %c0_4 = arith.constant 0 : index
    %5 = vector.load %arg3[%c0_3, %c0_4] : memref<16x128xf32, #tpu.memory_space<vmem>>, vector<16x128xf32>
    tpu.vector_store %arg3[%c0_3, %c0_4], %4 {strides = array<i32>} : memref<16x128xf32, #tpu.memory_space<vmem>>, vector<16x128xf32>,
    return
  }
  func.func @transform_0(%arg0: i32) -> (i32, i32) {
    %c0_i32 = arith.constant 0 : i32
    %c0_i32_0 = arith.constant 0 : i32
    return %arg0, %c0_i32 : i32, i32
  }
  func.func @transform_1(%arg0: i32) -> (i32, i32) {
    %c0_i32 = arith.constant 0 : i32
    %c0_i32_0 = arith.constant 0 : i32
    return %arg0, %c0_i32 : i32, i32
  }
  func.func @transform_2(%arg0: i32) -> (i32, i32) {
    %c0_i32 = arith.constant 0 : i32
    %c0_i32_0 = arith.constant 0 : i32
    return %arg0, %c0_i32 : i32, i32
  }
}

</mosaic_0001>

<llo_original>
// kernel: mf_forward.1
$region0: #{mf_forward.1}
  #allocation0 [shape = 'u32[]', space=smem, size = 0x4, offset = 0x4, fixed_abs, tag = 'smem constant byte address 0x4 - core index']
  #allocation1 [shape = 'u32[144,128]{1,0:T(1,128)}', space=vmem, size = 0x12000, scoped, tag = 'internal scratch']
  %s0 = inlined_call_operand.vmem [shape: f32[2048,128], index: 0, kind: input, shape index: {}]
  %s1 = inlined_call_operand.vmem [shape: f32[2048,128], index: 1, kind: input, shape index: {}]
  %s2 = inlined_call_operand.vmem [shape: f32[16,128], index: 2, kind: output, shape index: {}]
  %s3 = sld [smem:[#allocation0]]
  $region18: #{mf_forward.1} parent=0
    _
  %s5 = ssub.s32 1, %s3
  %s6 = scalar_select 0, %s5, %s3
  // Predicated region
  $region2: #{mf_forward.1} parent=0 // pred_check
    _
  $region3: #{mf_forward.1} parent=0 // pred_check_branch
    %8 = sbr.rel (0) target = $region5
  $region4: #{mf_forward.1} parent=0 // pred_region
    _
  $region5: #{mf_forward.1} parent=0 // pred_fallthru
    _
  // Predicated region
  $region6: #{mf_forward.1} parent=0 // pred_check
    _
  $region7: #{mf_forward.1} parent=0 // pred_check_branch
    %10 = sbr.rel (0) target = $region9
  $region8: #{mf_forward.1} parent=0 // pred_region
    _
  $region9: #{mf_forward.1} parent=0 // pred_fallthru
    _
  %v11 = vld [vmem:[%s0] sm:$0xff]
  %v12 = vld [vmem:[%s0 + $0x8] sm:$0xff]
  %v13 = vld [vmem:[%s0 + $0x10] sm:$0xff]
  %v14 = vld [vmem:[%s0 + $0x18] sm:$0xff]
  %v15 = vld [vmem:[%s0 + $0x20] sm:$0xff]
  %v16 = vld [vmem:[%s0 + $0x28] sm:$0xff]
  %v17 = vld [vmem:[%s0 + $0x30] sm:$0xff]
  %v18 = vld [vmem:[%s0 + $0x38] sm:$0xff]
  %v19 = vld [vmem:[%s0 + $0x40] sm:$0xff]
  %v20 = vld [vmem:[%s0 + $0x48] sm:$0xff]
  %v21 = vld [vmem:[%s0 + $0x50] sm:$0xff]
  %v22 = vld [vmem:[%s0 + $0x58] sm:$0xff]
  %v23 = vld [vmem:[%s0 + $0x60] sm:$0xff]
  %v24 = vld [vmem:[%s0 + $0x68] sm:$0xff]
  %v25 = vld [vmem:[%s0 + $0x70] sm:$0xff]
  %v26 = vld [vmem:[%s0 + $0x78] sm:$0xff]
  %v27 = vld [vmem:[%s0 + $0x80] sm:$0xff]
  %v28 = vld [vmem:[%s0 + $0x88] sm:$0xff]
  %v29 = vld [vmem:[%s0 + $0x90] sm:$0xff]
  %v30 = vld [vmem:[%s0 + $0x98] sm:$0xff]
  %v31 = vld [vmem:[%s0 + $0xa0] sm:$0xff]
  %v32 = vld [vmem:[%s0 + $0xa8] sm:$0xff]
  %v33 = vld [vmem:[%s0 + $0xb0] sm:$0xff]
  %v34 = vld [vmem:[%s0 + $0xb8] sm:$0xff]
  %v35 = vld [vmem:[%s0 + $0xc0] sm:$0xff]
  %v36 = vld [vmem:[%s0 + $0xc8] sm:$0xff]
  %v37 = vld [vmem:[%s0 + $0xd0] sm:$0xff]
  %v38 = vld [vmem:[%s0 + $0xd8] sm:$0xff]
  %v39 = vld [vmem:[%s0 + $0xe0] sm:$0xff]
  %v40 = vld [vmem:[%s0 + $0xe8] sm:$0xff]
  %v41 = vld [vmem:[%s0 + $0xf0] sm:$0xff]
  %v42 = vld [vmem:[%s0 + $0xf8] sm:$0xff]
  %v43 = vld [vmem:[%s0 + $0x100] sm:$0xff]
  %v44 = vld [vmem:[%s0 + $0x108] sm:$0xff]
  %v45 = vld [vmem:[%s0 + $0x110] sm:$0xff]
  %v46 = vld [vmem:[%s0 + $0x118] sm:$0xff]
  %v47 = vld [vmem:[%s0 + $0x120] sm:$0xff]
  %v48 = vld [vmem:[%s0 + $0x128] sm:$0xff]
  %v49 = vld [vmem:[%s0 + $0x130] sm:$0xff]
  %v50 = vld [vmem:[%s0 + $0x138] sm:$0xff]
  %v51 = vld [vmem:[%s0 + $0x140] sm:$0xff]
  %v52 = vld [vmem:[%s0 + $0x148] sm:$0xff]
  %v53 = vld [vmem:[%s0 + $0x150] sm:$0xff]
  %v54 = vld [vmem:[%s0 + $0x158] sm:$0xff]
  %v55 = vld [vmem:[%s0 + $0x160] sm:$0xff]
  %v56 = vld [vmem:[%s0 + $0x168] sm:$0xff]
  %v57 = vld [vmem:[%s0 + $0x170] sm:$0xff]
  %v58 = vld [vmem:[%s0 + $0x178] sm:$0xff]
  %v59 = vld [vmem:[%s0 + $0x180] sm:$0xff]
  %v60 = vld [vmem:[%s0 + $0x188] sm:$0xff]
  %v61 = vld [vmem:[%s0 + $0x190] sm:$0xff]
  %v62 = vld [vmem:[%s0 + $0x198] sm:$0xff]
  %v63 = vld [vmem:[%s0 + $0x1a0] sm:$0xff]
  %v64 = vld [vmem:[%s0 + $0x1a8] sm:$0xff]
  %v65 = vld [vmem:[%s0 + $0x1b0] sm:$0xff]
  %v66 = vld [vmem:[%s0 + $0x1b8] sm:$0xff]
  %v67 = vld [vmem:[%s0 + $0x1c0] sm:$0xff]
  %v68 = vld [vmem:[%s0 + $0x1c8] sm:$0xff]
  %v69 = vld [vmem:[%s0 + $0x1d0] sm:$0xff]
  %v70 = vld [vmem:[%s0 + $0x1d8] sm:$0xff]
  %v71 = vld [vmem:[%s0 + $0x1e0] sm:$0xff]
  %v72 = vld [vmem:[%s0 + $0x1e8] sm:$0xff]
  %v73 = vld [vmem:[%s0 + $0x1f0] sm:$0xff]
  %v74 = vld [vmem:[%s0 + $0x1f8] sm:$0xff]
  %v75 = vld [vmem:[%s0 + $0x200] sm:$0xff]
  %v76 = vld [vmem:[%s0 + $0x208] sm:$0xff]
  %v77 = vld [vmem:[%s0 + $0x210] sm:$0xff]
  %v78 = vld [vmem:[%s0 + $0x218] sm:$0xff]
  %v79 = vld [vmem:[%s0 + $0x220] sm:$0xff]
  %v80 = vld [vmem:[%s0 + $0x228] sm:$0xff]
  %v81 = vld [vmem:[%s0 + $0x230] sm:$0xff]
  %v82 = vld [vmem:[%s0 + $0x238] sm:$0xff]
  %v83 = vld [vmem:[%s0 + $0x240] sm:$0xff]
  %v84 = vld [vmem:[%s0 + $0x248] sm:$0xff]
  %v85 = vld [vmem:[%s0 + $0x250] sm:$0xff]
  %v86 = vld [vmem:[%s0 + $0x258] sm:$0xff]
  %v87 = vld [vmem:[%s0 + $0x260] sm:$0xff]
  %v88 = vld [vmem:[%s0 + $0x268] sm:$0xff]
  %v89 = vld [vmem:[%s0 + $0x270] sm:$0xff]
  %v90 = vld [vmem:[%s0 + $0x278] sm:$0xff]
  %v91 = vld [vmem:[%s0 + $0x280] sm:$0xff]
  %v92 = vld [vmem:[%s0 + $0x288] sm:$0xff]
  %v93 = vld [vmem:[%s0 + $0x290] sm:$0xff]
  %v94 = vld [vmem:[%s0 + $0x298] sm:$0xff]
  %v95 = vld [vmem:[%s0 + $0x2a0] sm:$0xff]
  %v96 = vld [vmem:[%s0 + $0x2a8] sm:$0xff]
  %v97 = vld [vmem:[%s0 + $0x2b0] sm:$0xff]
  %v98 = vld [vmem:[%s0 + $0x2b8] sm:$0xff]
  %v99 = vld [vmem:[%s0 + $0x2c0] sm:$0xff]
  %v100 = vld [vmem:[%s0 + $0x2c8] sm:$0xff]
  %v101 = vld [vmem:[%s0 + $0x2d0] sm:$0xff]
  %v102 = vld [vmem:[%s0 + $0x2d8] sm:$0xff]
  %v103 = vld [vmem:[%s0 + $0x2e0] sm:$0xff]
  %v104 = vld [vmem:[%s0 + $0x2e8] sm:$0xff]
  %v105 = vld [vmem:[%s0 + $0x2f0] sm:$0xff]
  %v106 = vld [vmem:[%s0 + $0x2f8] sm:$0xff]
  %v107 = vld [vmem:[%s0 + $0x300] sm:$0xff]
  %v108 = vld [vmem:[%s0 + $0x308] sm:$0xff]
  %v109 = vld [vmem:[%s0 + $0x310] sm:$0xff]
  %v110 = vld [vmem:[%s0 + $0x318] sm:$0xff]
  %v111 = vld [vmem:[%s0 + $0x320] sm:$0xff]
  %v112 = vld [vmem:[%s0 + $0x328] sm:$0xff]
  %v113 = vld [vmem:[%s0 + $0x330] sm:$0xff]
  %v114 = vld [vmem:[%s0 + $0x338] sm:$0xff]
  %v115 = vld [vmem:[%s0 + $0x340] sm:$0xff]
  %v116 = vld [vmem:[%s0 + $0x348] sm:$0xff]
  %v117 = vld [vmem:[%s0 + $0x350] sm:$0xff]
  %v118 = vld [vmem:[%s0 + $0x358] sm:$0xff]
  %v119 = vld [vmem:[%s0 + $0x360] sm:$0xff]
  %v120 = vld [vmem:[%s0 + $0x368] sm:$0xff]
  %v121 = vld [vmem:[%s0 + $0x370] sm:$0xff]
  %v122 = vld [vmem:[%s0 + $0x378] sm:$0xff]
  %v123 = vld [vmem:[%s0 + $0x380] sm:$0xff]
  %v124 = vld [vmem:[%s0 + $0x388] sm:$0xff]
  %v125 = vld [vmem:[%s0 + $0x390] sm:$0xff]
  %v126 = vld [vmem:[%s0 + $0x398] sm:$0xff]
  %v127 = vld [vmem:[%s0 + $0x3a0] sm:$0xff]
  %v128 = vld [vmem:[%s0 + $0x3a8] sm:$0xff]
  %v129 = vld [vmem:[%s0 + $0x3b0] sm:$0xff]
  %v130 = vld [vmem:[%s0 + $0x3b8] sm:$0xff]
  %v131 = vld [vmem:[%s0 + $0x3c0] sm:$0xff]
  %v132 = vld [vmem:[%s0 + $0x3c8] sm:$0xff]
  %v133 = vld [vmem:[%s0 + $0x3d0] sm:$0xff]
  %v134 = vld [vmem:[%s0 + $0x3d8] sm:$0xff]
  %v135 = vld [vmem:[%s0 + $0x3e0] sm:$0xff]
  %v136 = vld [vmem:[%s0 + $0x3e8] sm:$0xff]
  %v137 = vld [vmem:[%s0 + $0x3f0] sm:$0xff]
  %v138 = vld [vmem:[%s0 + $0x3f8] sm:$0xff]
  %v139 = vld [vmem:[%s0 + $0x400] sm:$0xff]
  %v140 = vld [vmem:[%s0 + $0x408] sm:$0xff]
  %v141 = vld [vmem:[%s0 + $0x410] sm:$0xff]
  %v142 = vld [vmem:[%s0 + $0x418] sm:$0xff]
  %v143 = vld [vmem:[%s0 + $0x420] sm:$0xff]
  %v144 = vld [vmem:[%s0 + $0x428] sm:$0xff]
  %v145 = vld [vmem:[%s0 + $0x430] sm:$0xff]
  %v146 = vld [vmem:[%s0 + $0x438] sm:$0xff]
  %v147 = vld [vmem:[%s0 + $0x440] sm:$0xff]
  %v148 = vld [vmem:[%s0 + $0x448] sm:$0xff]
  %v149 = vld [vmem:[%s0 + $0x450] sm:$0xff]
  %v150 = vld [vmem:[%s0 + $0x458] sm:$0xff]
  %v151 = vld [vmem:[%s0 + $0x460] sm:$0xff]
  %v152 = vld [vmem:[%s0 + $0x468] sm:$0xff]
  %v153 = vld [vmem:[%s0 + $0x470] sm:$0xff]
  %v154 = vld [vmem:[%s0 + $0x478] sm:$0xff]
  %v155 = vld [vmem:[%s0 + $0x480] sm:$0xff]
  %v156 = vld [vmem:[%s0 + $0x488] sm:$0xff]
  %v157 = vld [vmem:[%s0 + $0x490] sm:$0xff]
  %v158 = vld [vmem:[%s0 + $0x498] sm:$0xff]
  %v159 = vld [vmem:[%s0 + $0x4a0] sm:$0xff]
  %v160 = vld [vmem:[%s0 + $0x4a8] sm:$0xff]
  %v161 = vld [vmem:[%s0 + $0x4b0] sm:$0xff]
  %v162 = vld [vmem:[%s0 + $0x4b8] sm:$0xff]
  %v163 = vld [vmem:[%s0 + $0x4c0] sm:$0xff]
  %v164 = vld [vmem:[%s0 + $0x4c8] sm:$0xff]
  %v165 = vld [vmem:[%s0 + $0x4d0] sm:$0xff]
  %v166 = vld [vmem:[%s0 + $0x4d8] sm:$0xff]
  %v167 = vld [vmem:[%s0 + $0x4e0] sm:$0xff]
  %v168 = vld [vmem:[%s0 + $0x4e8] sm:$0xff]
  %v169 = vld [vmem:[%s0 + $0x4f0] sm:$0xff]
  %v170 = vld [vmem:[%s0 + $0x4f8] sm:$0xff]
  %v171 = vld [vmem:[%s0 + $0x500] sm:$0xff]
  %v172 = vld [vmem:[%s0 + $0x508] sm:$0xff]
  %v173 = vld [vmem:[%s0 + $0x510] sm:$0xff]
  %v174 = vld [vmem:[%s0 + $0x518] sm:$0xff]
  %v175 = vld [vmem:[%s0 + $0x520] sm:$0xff]
  %v176 = vld [vmem:[%s0 + $0x528] sm:$0xff]
  %v177 = vld [vmem:[%s0 + $0x530] sm:$0xff]
  %v178 = vld [vmem:[%s0 + $0x538] sm:$0xff]
  %v179 = vld [vmem:[%s0 + $0x540] sm:$0xff]
  %v180 = vld [vmem:[%s0 + $0x548] sm:$0xff]
  %v181 = vld [vmem:[%s0 + $0x550] sm:$0xff]
  %v182 = vld [vmem:[%s0 + $0x558] sm:$0xff]
  %v183 = vld [vmem:[%s0 + $0x560] sm:$0xff]
  %v184 = vld [vmem:[%s0 + $0x568] sm:$0xff]
  %v185 = vld [vmem:[%s0 + $0x570] sm:$0xff]
  %v186 = vld [vmem:[%s0 + $0x578] sm:$0xff]
  %v187 = vld [vmem:[%s0 + $0x580] sm:$0xff]
  %v188 = vld [vmem:[%s0 + $0x588] sm:$0xff]
  %v189 = vld [vmem:[%s0 + $0x590] sm:$0xff]
  %v190 = vld [vmem:[%s0 + $0x598] sm:$0xff]
  %v191 = vld [vmem:[%s0 + $0x5a0] sm:$0xff]
  %v192 = vld [vmem:[%s0 + $0x5a8] sm:$0xff]
  %v193 = vld [vmem:[%s0 + $0x5b0] sm:$0xff]
  %v194 = vld [vmem:[%s0 + $0x5b8] sm:$0xff]
  %v195 = vld [vmem:[%s0 + $0x5c0] sm:$0xff]
  %v196 = vld [vmem:[%s0 + $0x5c8] sm:$0xff]
  %v197 = vld [vmem:[%s0 + $0x5d0] sm:$0xff]
  %v198 = vld [vmem:[%s0 + $0x5d8] sm:$0xff]
  %v199 = vld [vmem:[%s0 + $0x5e0] sm:$0xff]
  %v200 = vld [vmem:[%s0 + $0x5e8] sm:$0xff]
  %v201 = vld [vmem:[%s0 + $0x5f0] sm:$0xff]
  %v202 = vld [vmem:[%s0 + $0x5f8] sm:$0xff]
  %v203 = vld [vmem:[%s0 + $0x600] sm:$0xff]
  %v204 = vld [vmem:[%s0 + $0x608] sm:$0xff]
  %v205 = vld [vmem:[%s0 + $0x610] sm:$0xff]
  %v206 = vld [vmem:[%s0 + $0x618] sm:$0xff]
  %v207 = vld [vmem:[%s0 + $0x620] sm:$0xff]
  %v208 = vld [vmem:[%s0 + $0x628] sm:$0xff]
  %v209 = vld [vmem:[%s0 + $0x630] sm:$0xff]
  %v210 = vld [vmem:[%s0 + $0x638] sm:$0xff]
  %v211 = vld [vmem:[%s0 + $0x640] sm:$0xff]
  %v212 = vld [vmem:[%s0 + $0x648] sm:$0xff]
  %v213 = vld [vmem:[%s0 + $0x650] sm:$0xff]
  %v214 = vld [vmem:[%s0 + $0x658] sm:$0xff]
  %v215 = vld [vmem:[%s0 + $0x660] sm:$0xff]
  %v216 = vld [vmem:[%s0 + $0x668] sm:$0xff]
  %v217 = vld [vmem:[%s0 + $0x670] sm:$0xff]
  %v218 = vld [vmem:[%s0 + $0x678] sm:$0xff]
  %v219 = vld [vmem:[%s0 + $0x680] sm:$0xff]
  %v220 = vld [vmem:[%s0 + $0x688] sm:$0xff]
  %v221 = vld [vmem:[%s0 + $0x690] sm:$0xff]
  %v222 = vld [vmem:[%s0 + $0x698] sm:$0xff]
  %v223 = vld [vmem:[%s0 + $0x6a0] sm:$0xff]
  %v224 = vld [vmem:[%s0 + $0x6a8] sm:$0xff]
  %v225 = vld [vmem:[%s0 + $0x6b0] sm:$0xff]
  %v226 = vld [vmem:[%s0 + $0x6b8] sm:$0xff]
  %v227 = vld [vmem:[%s0 + $0x6c0] sm:$0xff]
  %v228 = vld [vmem:[%s0 + $0x6c8] sm:$0xff]
  %v229 = vld [vmem:[%s0 + $0x6d0] sm:$0xff]
  %v230 = vld [vmem:[%s0 + $0x6d8] sm:$0xff]
  %v231 = vld [vmem:[%s0 + $0x6e0] sm:$0xff]
  %v232 = vld [vmem:[%s0 + $0x6e8] sm:$0xff]
  %v233 = vld [vmem:[%s0 + $0x6f0] sm:$0xff]
  %v234 = vld [vmem:[%s0 + $0x6f8] sm:$0xff]
  %v235 = vld [vmem:[%s0 + $0x700] sm:$0xff]
  %v236 = vld [vmem:[%s0 + $0x708] sm:$0xff]
  %v237 = vld [vmem:[%s0 + $0x710] sm:$0xff]
  %v238 = vld [vmem:[%s0 + $0x718] sm:$0xff]
  %v239 = vld [vmem:[%s0 + $0x720] sm:$0xff]
  %v240 = vld [vmem:[%s0 + $0x728] sm:$0xff]
  %v241 = vld [vmem:[%s0 + $0x730] sm:$0xff]
  %v242 = vld [vmem:[%s0 + $0x738] sm:$0xff]
  %v243 = vld [vmem:[%s0 + $0x740] sm:$0xff]
  %v244 = vld [vmem:[%s0 + $0x748] sm:$0xff]
  %v245 = vld [vmem:[%s0 + $0x750] sm:$0xff]
  %v246 = vld [vmem:[%s0 + $0x758] sm:$0xff]
  %v247 = vld [vmem:[%s0 + $0x760] sm:$0xff]
  %v248 = vld [vmem:[%s0 + $0x768] sm:$0xff]
  %v249 = vld [vmem:[%s0 + $0x770] sm:$0xff]
  %v250 = vld [vmem:[%s0 + $0x778] sm:$0xff]
  %v251 = vld [vmem:[%s0 + $0x780] sm:$0xff]
  %v252 = vld [vmem:[%s0 + $0x788] sm:$0xff]
  %v253 = vld [vmem:[%s0 + $0x790] sm:$0xff]
  %v254 = vld [vmem:[%s0 + $0x798] sm:$0xff]
  %v255 = vld [vmem:[%s0 + $0x7a0] sm:$0xff]
  %v256 = vld [vmem:[%s0 + $0x7a8] sm:$0xff]
  %v257 = vld [vmem:[%s0 + $0x7b0] sm:$0xff]
  %v258 = vld [vmem:[%s0 + $0x7b8] sm:$0xff]
  %v259 = vld [vmem:[%s0 + $0x7c0] sm:$0xff]
  %v260 = vld [vmem:[%s0 + $0x7c8] sm:$0xff]
  %v261 = vld [vmem:[%s0 + $0x7d0] sm:$0xff]
  %v262 = vld [vmem:[%s0 + $0x7d8] sm:$0xff]
  %v263 = vld [vmem:[%s0 + $0x7e0] sm:$0xff]
  %v264 = vld [vmem:[%s0 + $0x7e8] sm:$0xff]
  %v265 = vld [vmem:[%s0 + $0x7f0] sm:$0xff]
  %v266 = vld [vmem:[%s0 + $0x7f8] sm:$0xff]
  %v267 = vld [vmem:[%s1] sm:$0xff]
  %v268 = vld [vmem:[%s1 + $0x8] sm:$0xff]
  %v269 = vld [vmem:[%s1 + $0x10] sm:$0xff]
  %v270 = vld [vmem:[%s1 + $0x18] sm:$0xff]
  %v271 = vld [vmem:[%s1 + $0x20] sm:$0xff]
  %v272 = vld [vmem:[%s1 + $0x28] sm:$0xff]
  %v273 = vld [vmem:[%s1 + $0x30] sm:$0xff]
  %v274 = vld [vmem:[%s1 + $0x38] sm:$0xff]
  %v275 = vld [vmem:[%s1 + $0x40] sm:$0xff]
  %v276 = vld [vmem:[%s1 + $0x48] sm:$0xff]
  %v277 = vld [vmem:[%s1 + $0x50] sm:$0xff]
  %v278 = vld [vmem:[%s1 + $0x58] sm:$0xff]
  %v279 = vld [vmem:[%s1 + $0x60] sm:$0xff]
  %v280 = vld [vmem:[%s1 + $0x68] sm:$0xff]
  %v281 = vld [vmem:[%s1 + $0x70] sm:$0xff]
  %v282 = vld [vmem:[%s1 + $0x78] sm:$0xff]
  %v283 = vld [vmem:[%s1 + $0x80] sm:$0xff]
  %v284 = vld [vmem:[%s1 + $0x88] sm:$0xff]
  %v285 = vld [vmem:[%s1 + $0x90] sm:$0xff]
  %v286 = vld [vmem:[%s1 + $0x98] sm:$0xff]
  %v287 = vld [vmem:[%s1 + $0xa0] sm:$0xff]
  %v288 = vld [vmem:[%s1 + $0xa8] sm:$0xff]
  %v289 = vld [vmem:[%s1 + $0xb0] sm:$0xff]
  %v290 = vld [vmem:[%s1 + $0xb8] sm:$0xff]
  %v291 = vld [vmem:[%s1 + $0xc0] sm:$0xff]
  %v292 = vld [vmem:[%s1 + $0xc8] sm:$0xff]
  %v293 = vld [vmem:[%s1 + $0xd0] sm:$0xff]
  %v294 = vld [vmem:[%s1 + $0xd8] sm:$0xff]
  %v295 = vld [vmem:[%s1 + $0xe0] sm:$0xff]
  %v296 = vld [vmem:[%s1 + $0xe8] sm:$0xff]
  %v297 = vld [vmem:[%s1 + $0xf0] sm:$0xff]
  %v298 = vld [vmem:[%s1 + $0xf8] sm:$0xff]
  %v299 = vld [vmem:[%s1 + $0x100] sm:$0xff]
  %v300 = vld [vmem:[%s1 + $0x108] sm:$0xff]
  %v301 = vld [vmem:[%s1 + $0x110] sm:$0xff]
  %v302 = vld [vmem:[%s1 + $0x118] sm:$0xff]
  %v303 = vld [vmem:[%s1 + $0x120] sm:$0xff]
  %v304 = vld [vmem:[%s1 + $0x128] sm:$0xff]
  %v305 = vld [vmem:[%s1 + $0x130] sm:$0xff]
  %v306 = vld [vmem:[%s1 + $0x138] sm:$0xff]
  %v307 = vld [vmem:[%s1 + $0x140] sm:$0xff]
  %v308 = vld [vmem:[%s1 + $0x148] sm:$0xff]
  %v309 = vld [vmem:[%s1 + $0x150] sm:$0xff]
  %v310 = vld [vmem:[%s1 + $0x158] sm:$0xff]
  %v311 = vld [vmem:[%s1 + $0x160] sm:$0xff]
  %v312 = vld [vmem:[%s1 + $0x168] sm:$0xff]
  %v313 = vld [vmem:[%s1 + $0x170] sm:$0xff]
  %v314 = vld [vmem:[%s1 + $0x178] sm:$0xff]
  %v315 = vld [vmem:[%s1 + $0x180] sm:$0xff]
  %v316 = vld [vmem:[%s1 + $0x188] sm:$0xff]
  %v317 = vld [vmem:[%s1 + $0x190] sm:$0xff]
  %v318 = vld [vmem:[%s1 + $0x198] sm:$0xff]
  %v319 = vld [vmem:[%s1 + $0x1a0] sm:$0xff]
  %v320 = vld [vmem:[%s1 + $0x1a8] sm:$0xff]
  %v321 = vld [vmem:[%s1 + $0x1b0] sm:$0xff]
  %v322 = vld [vmem:[%s1 + $0x1b8] sm:$0xff]
  %v323 = vld [vmem:[%s1 + $0x1c0] sm:$0xff]
  %v324 = vld [vmem:[%s1 + $0x1c8] sm:$0xff]
  %v325 = vld [vmem:[%s1 + $0x1d0] sm:$0xff]
  %v326 = vld [vmem:[%s1 + $0x1d8] sm:$0xff]
  %v327 = vld [vmem:[%s1 + $0x1e0] sm:$0xff]
  %v328 = vld [vmem:[%s1 + $0x1e8] sm:$0xff]
  %v329 = vld [vmem:[%s1 + $0x1f0] sm:$0xff]
  %v330 = vld [vmem:[%s1 + $0x1f8] sm:$0xff]
  %v331 = vld [vmem:[%s1 + $0x200] sm:$0xff]
  %v332 = vld [vmem:[%s1 + $0x208] sm:$0xff]
  %v333 = vld [vmem:[%s1 + $0x210] sm:$0xff]
  %v334 = vld [vmem:[%s1 + $0x218] sm:$0xff]
  %v335 = vld [vmem:[%s1 + $0x220] sm:$0xff]
  %v336 = vld [vmem:[%s1 + $0x228] sm:$0xff]
  %v337 = vld [vmem:[%s1 + $0x230] sm:$0xff]
  %v338 = vld [vmem:[%s1 + $0x238] sm:$0xff]
  %v339 = vld [vmem:[%s1 + $0x240] sm:$0xff]
  %v340 = vld [vmem:[%s1 + $0x248] sm:$0xff]
  %v341 = vld [vmem:[%s1 + $0x250] sm:$0xff]
  %v342 = vld [vmem:[%s1 + $0x258] sm:$0xff]
  %v343 = vld [vmem:[%s1 + $0x260] sm:$0xff]
  %v344 = vld [vmem:[%s1 + $0x268] sm:$0xff]
  %v345 = vld [vmem:[%s1 + $0x270] sm:$0xff]
  %v346 = vld [vmem:[%s1 + $0x278] sm:$0xff]
  %v347 = vld [vmem:[%s1 + $0x280] sm:$0xff]
  %v348 = vld [vmem:[%s1 + $0x288] sm:$0xff]
  %v349 = vld [vmem:[%s1 + $0x290] sm:$0xff]
  %v350 = vld [vmem:[%s1 + $0x298] sm:$0xff]
  %v351 = vld [vmem:[%s1 + $0x2a0] sm:$0xff]
  %v352 = vld [vmem:[%s1 + $0x2a8] sm:$0xff]
  %v353 = vld [vmem:[%s1 + $0x2b0] sm:$0xff]
  %v354 = vld [vmem:[%s1 + $0x2b8] sm:$0xff]
  %v355 = vld [vmem:[%s1 + $0x2c0] sm:$0xff]
  %v356 = vld [vmem:[%s1 + $0x2c8] sm:$0xff]
  %v357 = vld [vmem:[%s1 + $0x2d0] sm:$0xff]
  %v358 = vld [vmem:[%s1 + $0x2d8] sm:$0xff]
  %v359 = vld [vmem:[%s1 + $0x2e0] sm:$0xff]
  %v360 = vld [vmem:[%s1 + $0x2e8] sm:$0xff]
  %v361 = vld [vmem:[%s1 + $0x2f0] sm:$0xff]
  %v362 = vld [vmem:[%s1 + $0x2f8] sm:$0xff]
  %v363 = vld [vmem:[%s1 + $0x300] sm:$0xff]
  %v364 = vld [vmem:[%s1 + $0x308] sm:$0xff]
  %v365 = vld [vmem:[%s1 + $0x310] sm:$0xff]
  %v366 = vld [vmem:[%s1 + $0x318] sm:$0xff]
  %v367 = vld [vmem:[%s1 + $0x320] sm:$0xff]
  %v368 = vld [vmem:[%s1 + $0x328] sm:$0xff]
  %v369 = vld [vmem:[%s1 + $0x330] sm:$0xff]
  %v370 = vld [vmem:[%s1 + $0x338] sm:$0xff]
  %v371 = vld [vmem:[%s1 + $0x340] sm:$0xff]
  %v372 = vld [vmem:[%s1 + $0x348] sm:$0xff]
  %v373 = vld [vmem:[%s1 + $0x350] sm:$0xff]
  %v374 = vld [vmem:[%s1 + $0x358] sm:$0xff]
  %v375 = vld [vmem:[%s1 + $0x360] sm:$0xff]
  %v376 = vld [vmem:[%s1 + $0x368] sm:$0xff]
  %v377 = vld [vmem:[%s1 + $0x370] sm:$0xff]
  %v378 = vld [vmem:[%s1 + $0x378] sm:$0xff]
  %v379 = vld [vmem:[%s1 + $0x380] sm:$0xff]
  %v380 = vld [vmem:[%s1 + $0x388] sm:$0xff]
  %v381 = vld [vmem:[%s1 + $0x390] sm:$0xff]
  %v382 = vld [vmem:[%s1 + $0x398] sm:$0xff]
  %v383 = vld [vmem:[%s1 + $0x3a0] sm:$0xff]
  %v384 = vld [vmem:[%s1 + $0x3a8] sm:$0xff]
  %v385 = vld [vmem:[%s1 + $0x3b0] sm:$0xff]
  %v386 = vld [vmem:[%s1 + $0x3b8] sm:$0xff]
  %v387 = vld [vmem:[%s1 + $0x3c0] sm:$0xff]
  %v388 = vld [vmem:[%s1 + $0x3c8] sm:$0xff]
  %v389 = vld [vmem:[%s1 + $0x3d0] sm:$0xff]
  %v390 = vld [vmem:[%s1 + $0x3d8] sm:$0xff]
  %v391 = vld [vmem:[%s1 + $0x3e0] sm:$0xff]
  %v392 = vld [vmem:[%s1 + $0x3e8] sm:$0xff]
  %v393 = vld [vmem:[%s1 + $0x3f0] sm:$0xff]
  %v394 = vld [vmem:[%s1 + $0x3f8] sm:$0xff]
  %v395 = vld [vmem:[%s1 + $0x400] sm:$0xff]
  %v396 = vld [vmem:[%s1 + $0x408] sm:$0xff]
  %v397 = vld [vmem:[%s1 + $0x410] sm:$0xff]
  %v398 = vld [vmem:[%s1 + $0x418] sm:$0xff]
  %v399 = vld [vmem:[%s1 + $0x420] sm:$0xff]
  %v400 = vld [vmem:[%s1 + $0x428] sm:$0xff]
  %v401 = vld [vmem:[%s1 + $0x430] sm:$0xff]
  %v402 = vld [vmem:[%s1 + $0x438] sm:$0xff]
  %v403 = vld [vmem:[%s1 + $0x440] sm:$0xff]
  %v404 = vld [vmem:[%s1 + $0x448] sm:$0xff]
  %v405 = vld [vmem:[%s1 + $0x450] sm:$0xff]
  %v406 = vld [vmem:[%s1 + $0x458] sm:$0xff]
  %v407 = vld [vmem:[%s1 + $0x460] sm:$0xff]
  %v408 = vld [vmem:[%s1 + $0x468] sm:$0xff]
  %v409 = vld [vmem:[%s1 + $0x470] sm:$0xff]
  %v410 = vld [vmem:[%s1 + $0x478] sm:$0xff]
  %v411 = vld [vmem:[%s1 + $0x480] sm:$0xff]
  %v412 = vld [vmem:[%s1 + $0x488] sm:$0xff]
  %v413 = vld [vmem:[%s1 + $0x490] sm:$0xff]
  %v414 = vld [vmem:[%s1 + $0x498] sm:$0xff]
  %v415 = vld [vmem:[%s1 + $0x4a0] sm:$0xff]
  %v416 = vld [vmem:[%s1 + $0x4a8] sm:$0xff]
  %v417 = vld [vmem:[%s1 + $0x4b0] sm:$0xff]
  %v418 = vld [vmem:[%s1 + $0x4b8] sm:$0xff]
  %v419 = vld [vmem:[%s1 + $0x4c0] sm:$0xff]
  %v420 = vld [vmem:[%s1 + $0x4c8] sm:$0xff]
  %v421 = vld [vmem:[%s1 + $0x4d0] sm:$0xff]
  %v422 = vld [vmem:[%s1 + $0x4d8] sm:$0xff]
  %v423 = vld [vmem:[%s1 + $0x4e0] sm:$0xff]
  %v424 = vld [vmem:[%s1 + $0x4e8] sm:$0xff]
  %v425 = vld [vmem:[%s1 + $0x4f0] sm:$0xff]
  %v426 = vld [vmem:[%s1 + $0x4f8] sm:$0xff]
  %v427 = vld [vmem:[%s1 + $0x500] sm:$0xff]
  %v428 = vld [vmem:[%s1 + $0x508] sm:$0xff]
  %v429 = vld [vmem:[%s1 + $0x510] sm:$0xff]
  %v430 = vld [vmem:[%s1 + $0x518] sm:$0xff]
  %v431 = vld [vmem:[%s1 + $0x520] sm:$0xff]
  %v432 = vld [vmem:[%s1 + $0x528] sm:$0xff]
  %v433 = vld [vmem:[%s1 + $0x530] sm:$0xff]
  %v434 = vld [vmem:[%s1 + $0x538] sm:$0xff]
  %v435 = vld [vmem:[%s1 + $0x540] sm:$0xff]
  %v436 = vld [vmem:[%s1 + $0x548] sm:$0xff]
  %v437 = vld [vmem:[%s1 + $0x550] sm:$0xff]
  %v438 = vld [vmem:[%s1 + $0x558] sm:$0xff]
  %v439 = vld [vmem:[%s1 + $0x560] sm:$0xff]
  %v440 = vld [vmem:[%s1 + $0x568] sm:$0xff]
  %v441 = vld [vmem:[%s1 + $0x570] sm:$0xff]
  %v442 = vld [vmem:[%s1 + $0x578] sm:$0xff]
  %v443 = vld [vmem:[%s1 + $0x580] sm:$0xff]
  %v444 = vld [vmem:[%s1 + $0x588] sm:$0xff]
  %v445 = vld [vmem:[%s1 + $0x590] sm:$0xff]
  %v446 = vld [vmem:[%s1 + $0x598] sm:$0xff]
  %v447 = vld [vmem:[%s1 + $0x5a0] sm:$0xff]
  %v448 = vld [vmem:[%s1 + $0x5a8] sm:$0xff]
  %v449 = vld [vmem:[%s1 + $0x5b0] sm:$0xff]
  %v450 = vld [vmem:[%s1 + $0x5b8] sm:$0xff]
  %v451 = vld [vmem:[%s1 + $0x5c0] sm:$0xff]
  %v452 = vld [vmem:[%s1 + $0x5c8] sm:$0xff]
  %v453 = vld [vmem:[%s1 + $0x5d0] sm:$0xff]
  %v454 = vld [vmem:[%s1 + $0x5d8] sm:$0xff]
  %v455 = vld [vmem:[%s1 + $0x5e0] sm:$0xff]
  %v456 = vld [vmem:[%s1 + $0x5e8] sm:$0xff]
  %v457 = vld [vmem:[%s1 + $0x5f0] sm:$0xff]
  %v458 = vld [vmem:[%s1 + $0x5f8] sm:$0xff]
  %v459 = vld [vmem:[%s1 + $0x600] sm:$0xff]
  %v460 = vld [vmem:[%s1 + $0x608] sm:$0xff]
  %v461 = vld [vmem:[%s1 + $0x610] sm:$0xff]
  %v462 = vld [vmem:[%s1 + $0x618] sm:$0xff]
  %v463 = vld [vmem:[%s1 + $0x620] sm:$0xff]
  %v464 = vld [vmem:[%s1 + $0x628] sm:$0xff]
  %v465 = vld [vmem:[%s1 + $0x630] sm:$0xff]
  %v466 = vld [vmem:[%s1 + $0x638] sm:$0xff]
  %v467 = vld [vmem:[%s1 + $0x640] sm:$0xff]
  %v468 = vld [vmem:[%s1 + $0x648] sm:$0xff]
  %v469 = vld [vmem:[%s1 + $0x650] sm:$0xff]
  %v470 = vld [vmem:[%s1 + $0x658] sm:$0xff]
  %v471 = vld [vmem:[%s1 + $0x660] sm:$0xff]
  %v472 = vld [vmem:[%s1 + $0x668] sm:$0xff]
  %v473 = vld [vmem:[%s1 + $0x670] sm:$0xff]
  %v474 = vld [vmem:[%s1 + $0x678] sm:$0xff]
  %v475 = vld [vmem:[%s1 + $0x680] sm:$0xff]
  %v476 = vld [vmem:[%s1 + $0x688] sm:$0xff]
  %v477 = vld [vmem:[%s1 + $0x690] sm:$0xff]
  %v478 = vld [vmem:[%s1 + $0x698] sm:$0xff]
  %v479 = vld [vmem:[%s1 + $0x6a0] sm:$0xff]
  %v480 = vld [vmem:[%s1 + $0x6a8] sm:$0xff]
  %v481 = vld [vmem:[%s1 + $0x6b0] sm:$0xff]
  %v482 = vld [vmem:[%s1 + $0x6b8] sm:$0xff]
  %v483 = vld [vmem:[%s1 + $0x6c0] sm:$0xff]
  %v484 = vld [vmem:[%s1 + $0x6c8] sm:$0xff]
  %v485 = vld [vmem:[%s1 + $0x6d0] sm:$0xff]
  %v486 = vld [vmem:[%s1 + $0x6d8] sm:$0xff]
  %v487 = vld [vmem:[%s1 + $0x6e0] sm:$0xff]
  %v488 = vld [vmem:[%s1 + $0x6e8] sm:$0xff]
  %v489 = vld [vmem:[%s1 + $0x6f0] sm:$0xff]
  %v490 = vld [vmem:[%s1 + $0x6f8] sm:$0xff]
  %v491 = vld [vmem:[%s1 + $0x700] sm:$0xff]
  %v492 = vld [vmem:[%s1 + $0x708] sm:$0xff]
  %v493 = vld [vmem:[%s1 + $0x710] sm:$0xff]
  %v494 = vld [vmem:[%s1 + $0x718] sm:$0xff]
  %v495 = vld [vmem:[%s1 + $0x720] sm:$0xff]
  %v496 = vld [vmem:[%s1 + $0x728] sm:$0xff]
  %v497 = vld [vmem:[%s1 + $0x730] sm:$0xff]
  %v498 = vld [vmem:[%s1 + $0x738] sm:$0xff]
  %v499 = vld [vmem:[%s1 + $0x740] sm:$0xff]
  %v500 = vld [vmem:[%s1 + $0x748] sm:$0xff]
  %v501 = vld [vmem:[%s1 + $0x750] sm:$0xff]
  %v502 = vld [vmem:[%s1 + $0x758] sm:$0xff]
  %v503 = vld [vmem:[%s1 + $0x760] sm:$0xff]
  %v504 = vld [vmem:[%s1 + $0x768] sm:$0xff]
  %v505 = vld [vmem:[%s1 + $0x770] sm:$0xff]
  %v506 = vld [vmem:[%s1 + $0x778] sm:$0xff]
  %v507 = vld [vmem:[%s1 + $0x780] sm:$0xff]
  %v508 = vld [vmem:[%s1 + $0x788] sm:$0xff]
  %v509 = vld [vmem:[%s1 + $0x790] sm:$0xff]
  %v510 = vld [vmem:[%s1 + $0x798] sm:$0xff]
  %v511 = vld [vmem:[%s1 + $0x7a0] sm:$0xff]
  %v512 = vld [vmem:[%s1 + $0x7a8] sm:$0xff]
  %v513 = vld [vmem:[%s1 + $0x7b0] sm:$0xff]
  %v514 = vld [vmem:[%s1 + $0x7b8] sm:$0xff]
  %v515 = vld [vmem:[%s1 + $0x7c0] sm:$0xff]
  %v516 = vld [vmem:[%s1 + $0x7c8] sm:$0xff]
  %v517 = vld [vmem:[%s1 + $0x7d0] sm:$0xff]
  %v518 = vld [vmem:[%s1 + $0x7d8] sm:$0xff]
  %v519 = vld [vmem:[%s1 + $0x7e0] sm:$0xff]
  %v520 = vld [vmem:[%s1 + $0x7e8] sm:$0xff]
  %v521 = vld [vmem:[%s1 + $0x7f0] sm:$0xff]
  %v522 = vld [vmem:[%s1 + $0x7f8] sm:$0xff]
  %v523 = vmul.f32 %v11, %v267
  %v524 = vmul.f32 %v12, %v268
  %v525 = vmul.f32 %v13, %v269
  %v526 = vmul.f32 %v14, %v270
  %v527 = vmul.f32 %v15, %v271
  %v528 = vmul.f32 %v16, %v272
  %v529 = vmul.f32 %v17, %v273
  %v530 = vmul.f32 %v18, %v274
  %v531 = vmul.f32 %v19, %v275
  %v532 = vmul.f32 %v20, %v276
  %v533 = vmul.f32 %v21, %v277
  %v534 = vmul.f32 %v22, %v278
  %v535 = vmul.f32 %v23, %v279
  %v536 = vmul.f32 %v24, %v280
  %v537 = vmul.f32 %v25, %v281
  %v538 = vmul.f32 %v26, %v282
  %v539 = vmul.f32 %v27, %v283
  %v540 = vmul.f32 %v28, %v284
  %v541 = vmul.f32 %v29, %v285
  %v542 = vmul.f32 %v30, %v286
  %v543 = vmul.f32 %v31, %v287
  %v544 = vmul.f32 %v32, %v288
  %v545 = vmul.f32 %v33, %v289
  %v546 = vmul.f32 %v34, %v290
  %v547 = vmul.f32 %v35, %v291
  %v548 = vmul.f32 %v36, %v292
  %v549 = vmul.f32 %v37, %v293
  %v550 = vmul.f32 %v38, %v294
  %v551 = vmul.f32 %v39, %v295
  %v552 = vmul.f32 %v40, %v296
  %v553 = vmul.f32 %v41, %v297
  %v554 = vmul.f32 %v42, %v298
  %v555 = vmul.f32 %v43, %v299
  %v556 = vmul.f32 %v44, %v300
  %v557 = vmul.f32 %v45, %v301
  %v558 = vmul.f32 %v46, %v302
  %v559 = vmul.f32 %v47, %v303
  %v560 = vmul.f32 %v48, %v304
  %v561 = vmul.f32 %v49, %v305
  %v562 = vmul.f32 %v50, %v306
  %v563 = vmul.f32 %v51, %v307
  %v564 = vmul.f32 %v52, %v308
  %v565 = vmul.f32 %v53, %v309
  %v566 = vmul.f32 %v54, %v310
  %v567 = vmul.f32 %v55, %v311
  %v568 = vmul.f32 %v56, %v312
  %v569 = vmul.f32 %v57, %v313
  %v570 = vmul.f32 %v58, %v314
  %v571 = vmul.f32 %v59, %v315
  %v572 = vmul.f32 %v60, %v316
  %v573 = vmul.f32 %v61, %v317
  %v574 = vmul.f32 %v62, %v318
  %v575 = vmul.f32 %v63, %v319
  %v576 = vmul.f32 %v64, %v320
  %v577 = vmul.f32 %v65, %v321
  %v578 = vmul.f32 %v66, %v322
  %v579 = vmul.f32 %v67, %v323
  %v580 = vmul.f32 %v68, %v324
  %v581 = vmul.f32 %v69, %v325
  %v582 = vmul.f32 %v70, %v326
  %v583 = vmul.f32 %v71, %v327
  %v584 = vmul.f32 %v72, %v328
  %v585 = vmul.f32 %v73, %v329
  %v586 = vmul.f32 %v74, %v330
  %v587 = vmul.f32 %v75, %v331
  %v588 = vmul.f32 %v76, %v332
  %v589 = vmul.f32 %v77, %v333
  %v590 = vmul.f32 %v78, %v334
  %v591 = vmul.f32 %v79, %v335
  %v592 = vmul.f32 %v80, %v336
  %v593 = vmul.f32 %v81, %v337
  %v594 = vmul.f32 %v82, %v338
  %v595 = vmul.f32 %v83, %v339
  %v596 = vmul.f32 %v84, %v340
  %v597 = vmul.f32 %v85, %v341
  %v598 = vmul.f32 %v86, %v342
  %v599 = vmul.f32 %v87, %v343
  %v600 = vmul.f32 %v88, %v344
  %v601 = vmul.f32 %v89, %v345
  %v602 = vmul.f32 %v90, %v346
  %v603 = vmul.f32 %v91, %v347
  %v604 = vmul.f32 %v92, %v348
  %v605 = vmul.f32 %v93, %v349
  %v606 = vmul.f32 %v94, %v350
  %v607 = vmul.f32 %v95, %v351
  %v608 = vmul.f32 %v96, %v352
  %v609 = vmul.f32 %v97, %v353
  %v610 = vmul.f32 %v98, %v354
  %v611 = vmul.f32 %v99, %v355
  %v612 = vmul.f32 %v100, %v356
  %v613 = vmul.f32 %v101, %v357
  %v614 = vmul.f32 %v102, %v358
  %v615 = vmul.f32 %v103, %v359
  %v616 = vmul.f32 %v104, %v360
  %v617 = vmul.f32 %v105, %v361
  %v618 = vmul.f32 %v106, %v362
  %v619 = vmul.f32 %v107, %v363
  %v620 = vmul.f32 %v108, %v364
  %v621 = vmul.f32 %v109, %v365
  %v622 = vmul.f32 %v110, %v366
  %v623 = vmul.f32 %v111, %v367
  %v624 = vmul.f32 %v112, %v368
  %v625 = vmul.f32 %v113, %v369
  %v626 = vmul.f32 %v114, %v370
  %v627 = vmul.f32 %v115, %v371
  %v628 = vmul.f32 %v116, %v372
  %v629 = vmul.f32 %v117, %v373
  %v630 = vmul.f32 %v118, %v374
  %v631 = vmul.f32 %v119, %v375
  %v632 = vmul.f32 %v120, %v376
  %v633 = vmul.f32 %v121, %v377
  %v634 = vmul.f32 %v122, %v378
  %v635 = vmul.f32 %v123, %v379
  %v636 = vmul.f32 %v124, %v380
  %v637 = vmul.f32 %v125, %v381
  %v638 = vmul.f32 %v126, %v382
  %v639 = vmul.f32 %v127, %v383
  %v640 = vmul.f32 %v128, %v384
  %v641 = vmul.f32 %v129, %v385
  %v642 = vmul.f32 %v130, %v386
  %v643 = vmul.f32 %v131, %v387
  %v644 = vmul.f32 %v132, %v388
  %v645 = vmul.f32 %v133, %v389
  %v646 = vmul.f32 %v134, %v390
  %v647 = vmul.f32 %v135, %v391
  %v648 = vmul.f32 %v136, %v392
  %v649 = vmul.f32 %v137, %v393
  %v650 = vmul.f32 %v138, %v394
  %v651 = vmul.f32 %v139, %v395
  %v652 = vmul.f32 %v140, %v396
  %v653 = vmul.f32 %v141, %v397
  %v654 = vmul.f32 %v142, %v398
  %v655 = vmul.f32 %v143, %v399
  %v656 = vmul.f32 %v144, %v400
  %v657 = vmul.f32 %v145, %v401
  %v658 = vmul.f32 %v146, %v402
  %v659 = vmul.f32 %v147, %v403
  %v660 = vmul.f32 %v148, %v404
  %v661 = vmul.f32 %v149, %v405
  %v662 = vmul.f32 %v150, %v406
  %v663 = vmul.f32 %v151, %v407
  %v664 = vmul.f32 %v152, %v408
  %v665 = vmul.f32 %v153, %v409
  %v666 = vmul.f32 %v154, %v410
  %v667 = vmul.f32 %v155, %v411
  %v668 = vmul.f32 %v156, %v412
  %v669 = vmul.f32 %v157, %v413
  %v670 = vmul.f32 %v158, %v414
  %v671 = vmul.f32 %v159, %v415
  %v672 = vmul.f32 %v160, %v416
  %v673 = vmul.f32 %v161, %v417
  %v674 = vmul.f32 %v162, %v418
  %v675 = vmul.f32 %v163, %v419
  %v676 = vmul.f32 %v164, %v420
  %v677 = vmul.f32 %v165, %v421
  %v678 = vmul.f32 %v166, %v422
  %v679 = vmul.f32 %v167, %v423
  %v680 = vmul.f32 %v168, %v424
  %v681 = vmul.f32 %v169, %v425
  %v682 = vmul.f32 %v170, %v426
  %v683 = vmul.f32 %v171, %v427
  %v684 = vmul.f32 %v172, %v428
  %v685 = vmul.f32 %v173, %v429
  %v686 = vmul.f32 %v174, %v430
  %v687 = vmul.f32 %v175, %v431
  %v688 = vmul.f32 %v176, %v432
  %v689 = vmul.f32 %v177, %v433
  %v690 = vmul.f32 %v178, %v434
  %v691 = vmul.f32 %v179, %v435
  %v692 = vmul.f32 %v180, %v436
  %v693 = vmul.f32 %v181, %v437
  %v694 = vmul.f32 %v182, %v438
  %v695 = vmul.f32 %v183, %v439
  %v696 = vmul.f32 %v184, %v440
  %v697 = vmul.f32 %v185, %v441
  %v698 = vmul.f32 %v186, %v442
  %v699 = vmul.f32 %v187, %v443
  %v700 = vmul.f32 %v188, %v444
  %v701 = vmul.f32 %v189, %v445
  %v702 = vmul.f32 %v190, %v446
  %v703 = vmul.f32 %v191, %v447
  %v704 = vmul.f32 %v192, %v448
  %v705 = vmul.f32 %v193, %v449
  %v706 = vmul.f32 %v194, %v450
  %v707 = vmul.f32 %v195, %v451
  %v708 = vmul.f32 %v196, %v452
  %v709 = vmul.f32 %v197, %v453
  %v710 = vmul.f32 %v198, %v454
  %v711 = vmul.f32 %v199, %v455
  %v712 = vmul.f32 %v200, %v456
  %v713 = vmul.f32 %v201, %v457
  %v714 = vmul.f32 %v202, %v458
  %v715 = vmul.f32 %v203, %v459
  %v716 = vmul.f32 %v204, %v460
  %v717 = vmul.f32 %v205, %v461
  %v718 = vmul.f32 %v206, %v462
  %v719 = vmul.f32 %v207, %v463
  %v720 = vmul.f32 %v208, %v464
  %v721 = vmul.f32 %v209, %v465
  %v722 = vmul.f32 %v210, %v466
  %v723 = vmul.f32 %v211, %v467
  %v724 = vmul.f32 %v212, %v468
  %v725 = vmul.f32 %v213, %v469
  %v726 = vmul.f32 %v214, %v470
  %v727 = vmul.f32 %v215, %v471
  %v728 = vmul.f32 %v216, %v472
  %v729 = vmul.f32 %v217, %v473
  %v730 = vmul.f32 %v218, %v474
  %v731 = vmul.f32 %v219, %v475
  %v732 = vmul.f32 %v220, %v476
  %v733 = vmul.f32 %v221, %v477
  %v734 = vmul.f32 %v222, %v478
  %v735 = vmul.f32 %v223, %v479
  %v736 = vmul.f32 %v224, %v480
  %v737 = vmul.f32 %v225, %v481
  %v738 = vmul.f32 %v226, %v482
  %v739 = vmul.f32 %v227, %v483
  %v740 = vmul.f32 %v228, %v484
  %v741 = vmul.f32 %v229, %v485
  %v742 = vmul.f32 %v230, %v486
  %v743 = vmul.f32 %v231, %v487
  %v744 = vmul.f32 %v232, %v488
  %v745 = vmul.f32 %v233, %v489
  %v746 = vmul.f32 %v234, %v490
  %v747 = vmul.f32 %v235, %v491
  %v748 = vmul.f32 %v236, %v492
  %v749 = vmul.f32 %v237, %v493
  %v750 = vmul.f32 %v238, %v494
  %v751 = vmul.f32 %v239, %v495
  %v752 = vmul.f32 %v240, %v496
  %v753 = vmul.f32 %v241, %v497
  %v754 = vmul.f32 %v242, %v498
  %v755 = vmul.f32 %v243, %v499
  %v756 = vmul.f32 %v244, %v500
  %v757 = vmul.f32 %v245, %v501
  %v758 = vmul.f32 %v246, %v502
  %v759 = vmul.f32 %v247, %v503
  %v760 = vmul.f32 %v248, %v504
  %v761 = vmul.f32 %v249, %v505
  %v762 = vmul.f32 %v250, %v506
  %v763 = vmul.f32 %v251, %v507
  %v764 = vmul.f32 %v252, %v508
  %v765 = vmul.f32 %v253, %v509
  %v766 = vmul.f32 %v254, %v510
  %v767 = vmul.f32 %v255, %v511
  %v768 = vmul.f32 %v256, %v512
  %v769 = vmul.f32 %v257, %v513
  %v770 = vmul.f32 %v258, %v514
  %v771 = vmul.f32 %v259, %v515
  %v772 = vmul.f32 %v260, %v516
  %v773 = vmul.f32 %v261, %v517
  %v774 = vmul.f32 %v262, %v518
  %v775 = vmul.f32 %v263, %v519
  %v776 = vmul.f32 %v264, %v520
  %v777 = vmul.f32 %v265, %v521
  %v778 = vmul.f32 %v266, %v522
  %779 = vadd.xlane.f32.xlu0 %v523
  %v780 = vpop.xlane.xlu0 %779
  %781 = vadd.xlane.f32.xlu0 %v524
  %v782 = vpop.xlane.xlu0 %781
  %783 = vadd.xlane.f32.xlu0 %v525
  %v784 = vpop.xlane.xlu0 %783
  %785 = vadd.xlane.f32.xlu0 %v526
  %v786 = vpop.xlane.xlu0 %785
  %787 = vadd.xlane.f32.xlu0 %v527
  %v788 = vpop.xlane.xlu0 %787
  %789 = vadd.xlane.f32.xlu0 %v528
  %v790 = vpop.xlane.xlu0 %789
  %791 = vadd.xlane.f32.xlu0 %v529
  %v792 = vpop.xlane.xlu0 %791
  %793 = vadd.xlane.f32.xlu0 %v530
  %v794 = vpop.xlane.xlu0 %793
  %795 = vadd.xlane.f32.xlu0 %v531
  %v796 = vpop.xlane.xlu0 %795
  %797 = vadd.xlane.f32.xlu0 %v532
  %v798 = vpop.xlane.xlu0 %797
  %799 = vadd.xlane.f32.xlu0 %v533
  %v800 = vpop.xlane.xlu0 %799
  %801 = vadd.xlane.f32.xlu0 %v534
  %v802 = vpop.xlane.xlu0 %801
  %803 = vadd.xlane.f32.xlu0 %v535
  %v804 = vpop.xlane.xlu0 %803
  %805 = vadd.xlane.f32.xlu0 %v536
  %v806 = vpop.xlane.xlu0 %805
  %807 = vadd.xlane.f32.xlu0 %v537
  %v808 = vpop.xlane.xlu0 %807
  %809 = vadd.xlane.f32.xlu0 %v538
  %v810 = vpop.xlane.xlu0 %809
  %811 = vadd.xlane.f32.xlu0 %v539
  %v812 = vpop.xlane.xlu0 %811
  %813 = vadd.xlane.f32.xlu0 %v540
  %v814 = vpop.xlane.xlu0 %813
  %815 = vadd.xlane.f32.xlu0 %v541
  %v816 = vpop.xlane.xlu0 %815
  %817 = vadd.xlane.f32.xlu0 %v542
  %v818 = vpop.xlane.xlu0 %817
  %819 = vadd.xlane.f32.xlu0 %v543
  %v820 = vpop.xlane.xlu0 %819
  %821 = vadd.xlane.f32.xlu0 %v544
  %v822 = vpop.xlane.xlu0 %821
  %823 = vadd.xlane.f32.xlu0 %v545
  %v824 = vpop.xlane.xlu0 %823
  %825 = vadd.xlane.f32.xlu0 %v546
  %v826 = vpop.xlane.xlu0 %825
  %827 = vadd.xlane.f32.xlu0 %v547
  %v828 = vpop.xlane.xlu0 %827
  %829 = vadd.xlane.f32.xlu0 %v548
  %v830 = vpop.xlane.xlu0 %829
  %831 = vadd.xlane.f32.xlu0 %v549
  %v832 = vpop.xlane.xlu0 %831
  %833 = vadd.xlane.f32.xlu0 %v550
  %v834 = vpop.xlane.xlu0 %833
  %835 = vadd.xlane.f32.xlu0 %v551
  %v836 = vpop.xlane.xlu0 %835
  %837 = vadd.xlane.f32.xlu0 %v552
  %v838 = vpop.xlane.xlu0 %837
  %839 = vadd.xlane.f32.xlu0 %v553
  %v840 = vpop.xlane.xlu0 %839
  %841 = vadd.xlane.f32.xlu0 %v554
  %v842 = vpop.xlane.xlu0 %841
  %843 = vadd.xlane.f32.xlu0 %v555
  %v844 = vpop.xlane.xlu0 %843
  %845 = vadd.xlane.f32.xlu0 %v556
  %v846 = vpop.xlane.xlu0 %845
  %847 = vadd.xlane.f32.xlu0 %v557
  %v848 = vpop.xlane.xlu0 %847
  %849 = vadd.xlane.f32.xlu0 %v558
  %v850 = vpop.xlane.xlu0 %849
  %851 = vadd.xlane.f32.xlu0 %v559
  %v852 = vpop.xlane.xlu0 %851
  %853 = vadd.xlane.f32.xlu0 %v560
  %v854 = vpop.xlane.xlu0 %853
  %855 = vadd.xlane.f32.xlu0 %v561
  %v856 = vpop.xlane.xlu0 %855
  %857 = vadd.xlane.f32.xlu0 %v562
  %v858 = vpop.xlane.xlu0 %857
  %859 = vadd.xlane.f32.xlu0 %v563
  %v860 = vpop.xlane.xlu0 %859
  %861 = vadd.xlane.f32.xlu0 %v564
  %v862 = vpop.xlane.xlu0 %861
  %863 = vadd.xlane.f32.xlu0 %v565
  %v864 = vpop.xlane.xlu0 %863
  %865 = vadd.xlane.f32.xlu0 %v566
  %v866 = vpop.xlane.xlu0 %865
  %867 = vadd.xlane.f32.xlu0 %v567
  %v868 = vpop.xlane.xlu0 %867
  %869 = vadd.xlane.f32.xlu0 %v568
  %v870 = vpop.xlane.xlu0 %869
  %871 = vadd.xlane.f32.xlu0 %v569
  %v872 = vpop.xlane.xlu0 %871
  %873 = vadd.xlane.f32.xlu0 %v570
  %v874 = vpop.xlane.xlu0 %873
  %875 = vadd.xlane.f32.xlu0 %v571
  %v876 = vpop.xlane.xlu0 %875
  %877 = vadd.xlane.f32.xlu0 %v572
  %v878 = vpop.xlane.xlu0 %877
  %879 = vadd.xlane.f32.xlu0 %v573
  %v880 = vpop.xlane.xlu0 %879
  %881 = vadd.xlane.f32.xlu0 %v574
  %v882 = vpop.xlane.xlu0 %881
  %883 = vadd.xlane.f32.xlu0 %v575
  %v884 = vpop.xlane.xlu0 %883
  %885 = vadd.xlane.f32.xlu0 %v576
  %v886 = vpop.xlane.xlu0 %885
  %887 = vadd.xlane.f32.xlu0 %v577
  %v888 = vpop.xlane.xlu0 %887
  %889 = vadd.xlane.f32.xlu0 %v578
  %v890 = vpop.xlane.xlu0 %889
  %891 = vadd.xlane.f32.xlu0 %v579
  %v892 = vpop.xlane.xlu0 %891
  %893 = vadd.xlane.f32.xlu0 %v580
  %v894 = vpop.xlane.xlu0 %893
  %895 = vadd.xlane.f32.xlu0 %v581
  %v896 = vpop.xlane.xlu0 %895
  %897 = vadd.xlane.f32.xlu0 %v582
  %v898 = vpop.xlane.xlu0 %897
  %899 = vadd.xlane.f32.xlu0 %v583
  %v900 = vpop.xlane.xlu0 %899
  %901 = vadd.xlane.f32.xlu0 %v584
  %v902 = vpop.xlane.xlu0 %901
  %903 = vadd.xlane.f32.xlu0 %v585
  %v904 = vpop.xlane.xlu0 %903
  %905 = vadd.xlane.f32.xlu0 %v586
  %v906 = vpop.xlane.xlu0 %905
  %907 = vadd.xlane.f32.xlu0 %v587
  %v908 = vpop.xlane.xlu0 %907
  %909 = vadd.xlane.f32.xlu0 %v588
  %v910 = vpop.xlane.xlu0 %909
  %911 = vadd.xlane.f32.xlu0 %v589
  %v912 = vpop.xlane.xlu0 %911
  %913 = vadd.xlane.f32.xlu0 %v590
  %v914 = vpop.xlane.xlu0 %913
  %915 = vadd.xlane.f32.xlu0 %v591
  %v916 = vpop.xlane.xlu0 %915
  %917 = vadd.xlane.f32.xlu0 %v592
  %v918 = vpop.xlane.xlu0 %917
  %919 = vadd.xlane.f32.xlu0 %v593
  %v920 = vpop.xlane.xlu0 %919
  %921 = vadd.xlane.f32.xlu0 %v594
  %v922 = vpop.xlane.xlu0 %921
  %923 = vadd.xlane.f32.xlu0 %v595
  %v924 = vpop.xlane.xlu0 %923
  %925 = vadd.xlane.f32.xlu0 %v596
  %v926 = vpop.xlane.xlu0 %925
  %927 = vadd.xlane.f32.xlu0 %v597
  %v928 = vpop.xlane.xlu0 %927
  %929 = vadd.xlane.f32.xlu0 %v598
  %v930 = vpop.xlane.xlu0 %929
  %931 = vadd.xlane.f32.xlu0 %v599
  %v932 = vpop.xlane.xlu0 %931
  %933 = vadd.xlane.f32.xlu0 %v600
  %v934 = vpop.xlane.xlu0 %933
  %935 = vadd.xlane.f32.xlu0 %v601
  %v936 = vpop.xlane.xlu0 %935
  %937 = vadd.xlane.f32.xlu0 %v602
  %v938 = vpop.xlane.xlu0 %937
  %939 = vadd.xlane.f32.xlu0 %v603
  %v940 = vpop.xlane.xlu0 %939
  %941 = vadd.xlane.f32.xlu0 %v604
  %v942 = vpop.xlane.xlu0 %941
  %943 = vadd.xlane.f32.xlu0 %v605
  %v944 = vpop.xlane.xlu0 %943
  %945 = vadd.xlane.f32.xlu0 %v606
  %v946 = vpop.xlane.xlu0 %945
  %947 = vadd.xlane.f32.xlu0 %v607
  %v948 = vpop.xlane.xlu0 %947
  %949 = vadd.xlane.f32.xlu0 %v608
  %v950 = vpop.xlane.xlu0 %949
  %951 = vadd.xlane.f32.xlu0 %v609
  %v952 = vpop.xlane.xlu0 %951
  %953 = vadd.xlane.f32.xlu0 %v610
  %v954 = vpop.xlane.xlu0 %953
  %955 = vadd.xlane.f32.xlu0 %v611
  %v956 = vpop.xlane.xlu0 %955
  %957 = vadd.xlane.f32.xlu0 %v612
  %v958 = vpop.xlane.xlu0 %957
  %959 = vadd.xlane.f32.xlu0 %v613
  %v960 = vpop.xlane.xlu0 %959
  %961 = vadd.xlane.f32.xlu0 %v614
  %v962 = vpop.xlane.xlu0 %961
  %963 = vadd.xlane.f32.xlu0 %v615
  %v964 = vpop.xlane.xlu0 %963
  %965 = vadd.xlane.f32.xlu0 %v616
  %v966 = vpop.xlane.xlu0 %965
  %967 = vadd.xlane.f32.xlu0 %v617
  %v968 = vpop.xlane.xlu0 %967
  %969 = vadd.xlane.f32.xlu0 %v618
  %v970 = vpop.xlane.xlu0 %969
  %971 = vadd.xlane.f32.xlu0 %v619
  %v972 = vpop.xlane.xlu0 %971
  %973 = vadd.xlane.f32.xlu0 %v620
  %v974 = vpop.xlane.xlu0 %973
  %975 = vadd.xlane.f32.xlu0 %v621
  %v976 = vpop.xlane.xlu0 %975
  %977 = vadd.xlane.f32.xlu0 %v622
  %v978 = vpop.xlane.xlu0 %977
  %979 = vadd.xlane.f32.xlu0 %v623
  %v980 = vpop.xlane.xlu0 %979
  %981 = vadd.xlane.f32.xlu0 %v624
  %v982 = vpop.xlane.xlu0 %981
  %983 = vadd.xlane.f32.xlu0 %v625
  %v984 = vpop.xlane.xlu0 %983
  %985 = vadd.xlane.f32.xlu0 %v626
  %v986 = vpop.xlane.xlu0 %985
  %987 = vadd.xlane.f32.xlu0 %v627
  %v988 = vpop.xlane.xlu0 %987
  %989 = vadd.xlane.f32.xlu0 %v628
  %v990 = vpop.xlane.xlu0 %989
  %991 = vadd.xlane.f32.xlu0 %v629
  %v992 = vpop.xlane.xlu0 %991
  %993 = vadd.xlane.f32.xlu0 %v630
  %v994 = vpop.xlane.xlu0 %993
  %995 = vadd.xlane.f32.xlu0 %v631
  %v996 = vpop.xlane.xlu0 %995
  %997 = vadd.xlane.f32.xlu0 %v632
  %v998 = vpop.xlane.xlu0 %997
  %999 = vadd.xlane.f32.xlu0 %v633
  %v1000 = vpop.xlane.xlu0 %999
  %1001 = vadd.xlane.f32.xlu0 %v634
  %v1002 = vpop.xlane.xlu0 %1001
  %1003 = vadd.xlane.f32.xlu0 %v635
  %v1004 = vpop.xlane.xlu0 %1003
  %1005 = vadd.xlane.f32.xlu0 %v636
  %v1006 = vpop.xlane.xlu0 %1005
  %1007 = vadd.xlane.f32.xlu0 %v637
  %v1008 = vpop.xlane.xlu0 %1007
  %1009 = vadd.xlane.f32.xlu0 %v638
  %v1010 = vpop.xlane.xlu0 %1009
  %1011 = vadd.xlane.f32.xlu0 %v639
  %v1012 = vpop.xlane.xlu0 %1011
  %1013 = vadd.xlane.f32.xlu0 %v640
  %v1014 = vpop.xlane.xlu0 %1013
  %1015 = vadd.xlane.f32.xlu0 %v641
  %v1016 = vpop.xlane.xlu0 %1015
  %1017 = vadd.xlane.f32.xlu0 %v642
  %v1018 = vpop.xlane.xlu0 %1017
  %1019 = vadd.xlane.f32.xlu0 %v643
  %v1020 = vpop.xlane.xlu0 %1019
  %1021 = vadd.xlane.f32.xlu0 %v644
  %v1022 = vpop.xlane.xlu0 %1021
  %1023 = vadd.xlane.f32.xlu0 %v645
  %v1024 = vpop.xlane.xlu0 %1023
  %1025 = vadd.xlane.f32.xlu0 %v646
  %v1026 = vpop.xlane.xlu0 %1025
  %1027 = vadd.xlane.f32.xlu0 %v647
  %v1028 = vpop.xlane.xlu0 %1027
  %1029 = vadd.xlane.f32.xlu0 %v648
  %v1030 = vpop.xlane.xlu0 %1029
  %1031 = vadd.xlane.f32.xlu0 %v649
  %v1032 = vpop.xlane.xlu0 %1031
  %1033 = vadd.xlane.f32.xlu0 %v650
  %v1034 = vpop.xlane.xlu0 %1033
  %1035 = vadd.xlane.f32.xlu0 %v651
  %v1036 = vpop.xlane.xlu0 %1035
  %1037 = vadd.xlane.f32.xlu0 %v652
  %v1038 = vpop.xlane.xlu0 %1037
  %1039 = vadd.xlane.f32.xlu0 %v653
  %v1040 = vpop.xlane.xlu0 %1039
  %1041 = vadd.xlane.f32.xlu0 %v654
  %v1042 = vpop.xlane.xlu0 %1041
  %1043 = vadd.xlane.f32.xlu0 %v655
  %v1044 = vpop.xlane.xlu0 %1043
  %1045 = vadd.xlane.f32.xlu0 %v656
  %v1046 = vpop.xlane.xlu0 %1045
  %1047 = vadd.xlane.f32.xlu0 %v657
  %v1048 = vpop.xlane.xlu0 %1047
  %1049 = vadd.xlane.f32.xlu0 %v658
  %v1050 = vpop.xlane.xlu0 %1049
  %1051 = vadd.xlane.f32.xlu0 %v659
  %v1052 = vpop.xlane.xlu0 %1051
  %1053 = vadd.xlane.f32.xlu0 %v660
  %v1054 = vpop.xlane.xlu0 %1053
  %1055 = vadd.xlane.f32.xlu0 %v661
  %v1056 = vpop.xlane.xlu0 %1055
  %1057 = vadd.xlane.f32.xlu0 %v662
  %v1058 = vpop.xlane.xlu0 %1057
  %1059 = vadd.xlane.f32.xlu0 %v663
  %v1060 = vpop.xlane.xlu0 %1059
  %1061 = vadd.xlane.f32.xlu0 %v664
  %v1062 = vpop.xlane.xlu0 %1061
  %1063 = vadd.xlane.f32.xlu0 %v665
  %v1064 = vpop.xlane.xlu0 %1063
  %1065 = vadd.xlane.f32.xlu0 %v666
  %v1066 = vpop.xlane.xlu0 %1065
  %1067 = vadd.xlane.f32.xlu0 %v667
  %v1068 = vpop.xlane.xlu0 %1067
  %1069 = vadd.xlane.f32.xlu0 %v668
  %v1070 = vpop.xlane.xlu0 %1069
  %1071 = vadd.xlane.f32.xlu0 %v669
  %v1072 = vpop.xlane.xlu0 %1071
  %1073 = vadd.xlane.f32.xlu0 %v670
  %v1074 = vpop.xlane.xlu0 %1073
  %1075 = vadd.xlane.f32.xlu0 %v671
  %v1076 = vpop.xlane.xlu0 %1075
  %1077 = vadd.xlane.f32.xlu0 %v672
  %v1078 = vpop.xlane.xlu0 %1077
  %1079 = vadd.xlane.f32.xlu0 %v673
  %v1080 = vpop.xlane.xlu0 %1079
  %1081 = vadd.xlane.f32.xlu0 %v674
  %v1082 = vpop.xlane.xlu0 %1081
  %1083 = vadd.xlane.f32.xlu0 %v675
  %v1084 = vpop.xlane.xlu0 %1083
  %1085 = vadd.xlane.f32.xlu0 %v676
  %v1086 = vpop.xlane.xlu0 %1085
  %1087 = vadd.xlane.f32.xlu0 %v677
  %v1088 = vpop.xlane.xlu0 %1087
  %1089 = vadd.xlane.f32.xlu0 %v678
  %v1090 = vpop.xlane.xlu0 %1089
  %1091 = vadd.xlane.f32.xlu0 %v679
  %v1092 = vpop.xlane.xlu0 %1091
  %1093 = vadd.xlane.f32.xlu0 %v680
  %v1094 = vpop.xlane.xlu0 %1093
  %1095 = vadd.xlane.f32.xlu0 %v681
  %v1096 = vpop.xlane.xlu0 %1095
  %1097 = vadd.xlane.f32.xlu0 %v682
  %v1098 = vpop.xlane.xlu0 %1097
  %1099 = vadd.xlane.f32.xlu0 %v683
  %v1100 = vpop.xlane.xlu0 %1099
  %1101 = vadd.xlane.f32.xlu0 %v684
  %v1102 = vpop.xlane.xlu0 %1101
  %1103 = vadd.xlane.f32.xlu0 %v685
  %v1104 = vpop.xlane.xlu0 %1103
  %1105 = vadd.xlane.f32.xlu0 %v686
  %v1106 = vpop.xlane.xlu0 %1105
  %1107 = vadd.xlane.f32.xlu0 %v687
  %v1108 = vpop.xlane.xlu0 %1107
  %1109 = vadd.xlane.f32.xlu0 %v688
  %v1110 = vpop.xlane.xlu0 %1109
  %1111 = vadd.xlane.f32.xlu0 %v689
  %v1112 = vpop.xlane.xlu0 %1111
  %1113 = vadd.xlane.f32.xlu0 %v690
  %v1114 = vpop.xlane.xlu0 %1113
  %1115 = vadd.xlane.f32.xlu0 %v691
  %v1116 = vpop.xlane.xlu0 %1115
  %1117 = vadd.xlane.f32.xlu0 %v692
  %v1118 = vpop.xlane.xlu0 %1117
  %1119 = vadd.xlane.f32.xlu0 %v693
  %v1120 = vpop.xlane.xlu0 %1119
  %1121 = vadd.xlane.f32.xlu0 %v694
  %v1122 = vpop.xlane.xlu0 %1121
  %1123 = vadd.xlane.f32.xlu0 %v695
  %v1124 = vpop.xlane.xlu0 %1123
  %1125 = vadd.xlane.f32.xlu0 %v696
  %v1126 = vpop.xlane.xlu0 %1125
  %1127 = vadd.xlane.f32.xlu0 %v697
  %v1128 = vpop.xlane.xlu0 %1127
  %1129 = vadd.xlane.f32.xlu0 %v698
  %v1130 = vpop.xlane.xlu0 %1129
  %1131 = vadd.xlane.f32.xlu0 %v699
  %v1132 = vpop.xlane.xlu0 %1131
  %1133 = vadd.xlane.f32.xlu0 %v700
  %v1134 = vpop.xlane.xlu0 %1133
  %1135 = vadd.xlane.f32.xlu0 %v701
  %v1136 = vpop.xlane.xlu0 %1135
  %1137 = vadd.xlane.f32.xlu0 %v702
  %v1138 = vpop.xlane.xlu0 %1137
  %1139 = vadd.xlane.f32.xlu0 %v703
  %v1140 = vpop.xlane.xlu0 %1139
  %1141 = vadd.xlane.f32.xlu0 %v704
  %v1142 = vpop.xlane.xlu0 %1141
  %1143 = vadd.xlane.f32.xlu0 %v705
  %v1144 = vpop.xlane.xlu0 %1143
  %1145 = vadd.xlane.f32.xlu0 %v706
  %v1146 = vpop.xlane.xlu0 %1145
  %1147 = vadd.xlane.f32.xlu0 %v707
  %v1148 = vpop.xlane.xlu0 %1147
  %1149 = vadd.xlane.f32.xlu0 %v708
  %v1150 = vpop.xlane.xlu0 %1149
  %1151 = vadd.xlane.f32.xlu0 %v709
  %v1152 = vpop.xlane.xlu0 %1151
  %1153 = vadd.xlane.f32.xlu0 %v710
  %v1154 = vpop.xlane.xlu0 %1153
  %1155 = vadd.xlane.f32.xlu0 %v711
  %v1156 = vpop.xlane.xlu0 %1155
  %1157 = vadd.xlane.f32.xlu0 %v712
  %v1158 = vpop.xlane.xlu0 %1157
  %1159 = vadd.xlane.f32.xlu0 %v713
  %v1160 = vpop.xlane.xlu0 %1159
  %1161 = vadd.xlane.f32.xlu0 %v714
  %v1162 = vpop.xlane.xlu0 %1161
  %1163 = vadd.xlane.f32.xlu0 %v715
  %v1164 = vpop.xlane.xlu0 %1163
  %1165 = vadd.xlane.f32.xlu0 %v716
  %v1166 = vpop.xlane.xlu0 %1165
  %1167 = vadd.xlane.f32.xlu0 %v717
  %v1168 = vpop.xlane.xlu0 %1167
  %1169 = vadd.xlane.f32.xlu0 %v718
  %v1170 = vpop.xlane.xlu0 %1169
  %1171 = vadd.xlane.f32.xlu0 %v719
  %v1172 = vpop.xlane.xlu0 %1171
  %1173 = vadd.xlane.f32.xlu0 %v720
  %v1174 = vpop.xlane.xlu0 %1173
  %1175 = vadd.xlane.f32.xlu0 %v721
  %v1176 = vpop.xlane.xlu0 %1175
  %1177 = vadd.xlane.f32.xlu0 %v722
  %v1178 = vpop.xlane.xlu0 %1177
  %1179 = vadd.xlane.f32.xlu0 %v723
  %v1180 = vpop.xlane.xlu0 %1179
  %1181 = vadd.xlane.f32.xlu0 %v724
  %v1182 = vpop.xlane.xlu0 %1181
  %1183 = vadd.xlane.f32.xlu0 %v725
  %v1184 = vpop.xlane.xlu0 %1183
  %1185 = vadd.xlane.f32.xlu0 %v726
  %v1186 = vpop.xlane.xlu0 %1185
  %1187 = vadd.xlane.f32.xlu0 %v727
  %v1188 = vpop.xlane.xlu0 %1187
  %1189 = vadd.xlane.f32.xlu0 %v728
  %v1190 = vpop.xlane.xlu0 %1189
  %1191 = vadd.xlane.f32.xlu0 %v729
  %v1192 = vpop.xlane.xlu0 %1191
  %1193 = vadd.xlane.f32.xlu0 %v730
  %v1194 = vpop.xlane.xlu0 %1193
  %1195 = vadd.xlane.f32.xlu0 %v731
  %v1196 = vpop.xlane.xlu0 %1195
  %1197 = vadd.xlane.f32.xlu0 %v732
  %v1198 = vpop.xlane.xlu0 %1197
  %1199 = vadd.xlane.f32.xlu0 %v733
  %v1200 = vpop.xlane.xlu0 %1199
  %1201 = vadd.xlane.f32.xlu0 %v734
  %v1202 = vpop.xlane.xlu0 %1201
  %1203 = vadd.xlane.f32.xlu0 %v735
  %v1204 = vpop.xlane.xlu0 %1203
  %1205 = vadd.xlane.f32.xlu0 %v736
  %v1206 = vpop.xlane.xlu0 %1205
  %1207 = vadd.xlane.f32.xlu0 %v737
  %v1208 = vpop.xlane.xlu0 %1207
  %1209 = vadd.xlane.f32.xlu0 %v738
  %v1210 = vpop.xlane.xlu0 %1209
  %1211 = vadd.xlane.f32.xlu0 %v739
  %v1212 = vpop.xlane.xlu0 %1211
  %1213 = vadd.xlane.f32.xlu0 %v740
  %v1214 = vpop.xlane.xlu0 %1213
  %1215 = vadd.xlane.f32.xlu0 %v741
  %v1216 = vpop.xlane.xlu0 %1215
  %1217 = vadd.xlane.f32.xlu0 %v742
  %v1218 = vpop.xlane.xlu0 %1217
  %1219 = vadd.xlane.f32.xlu0 %v743
  %v1220 = vpop.xlane.xlu0 %1219
  %1221 = vadd.xlane.f32.xlu0 %v744
  %v1222 = vpop.xlane.xlu0 %1221
  %1223 = vadd.xlane.f32.xlu0 %v745
  %v1224 = vpop.xlane.xlu0 %1223
  %1225 = vadd.xlane.f32.xlu0 %v746
  %v1226 = vpop.xlane.xlu0 %1225
  %1227 = vadd.xlane.f32.xlu0 %v747
  %v1228 = vpop.xlane.xlu0 %1227
  %1229 = vadd.xlane.f32.xlu0 %v748
  %v1230 = vpop.xlane.xlu0 %1229
  %1231 = vadd.xlane.f32.xlu0 %v749
  %v1232 = vpop.xlane.xlu0 %1231
  %1233 = vadd.xlane.f32.xlu0 %v750
  %v1234 = vpop.xlane.xlu0 %1233
  %1235 = vadd.xlane.f32.xlu0 %v751
  %v1236 = vpop.xlane.xlu0 %1235
  %1237 = vadd.xlane.f32.xlu0 %v752
  %v1238 = vpop.xlane.xlu0 %1237
  %1239 = vadd.xlane.f32.xlu0 %v753
  %v1240 = vpop.xlane.xlu0 %1239
  %1241 = vadd.xlane.f32.xlu0 %v754
  %v1242 = vpop.xlane.xlu0 %1241
  %1243 = vadd.xlane.f32.xlu0 %v755
  %v1244 = vpop.xlane.xlu0 %1243
  %1245 = vadd.xlane.f32.xlu0 %v756
  %v1246 = vpop.xlane.xlu0 %1245
  %1247 = vadd.xlane.f32.xlu0 %v757
  %v1248 = vpop.xlane.xlu0 %1247
  %1249 = vadd.xlane.f32.xlu0 %v758
  %v1250 = vpop.xlane.xlu0 %1249
  %1251 = vadd.xlane.f32.xlu0 %v759
  %v1252 = vpop.xlane.xlu0 %1251
  %1253 = vadd.xlane.f32.xlu0 %v760
  %v1254 = vpop.xlane.xlu0 %1253
  %1255 = vadd.xlane.f32.xlu0 %v761
  %v1256 = vpop.xlane.xlu0 %1255
  %1257 = vadd.xlane.f32.xlu0 %v762
  %v1258 = vpop.xlane.xlu0 %1257
  %1259 = vadd.xlane.f32.xlu0 %v763
  %v1260 = vpop.xlane.xlu0 %1259
  %1261 = vadd.xlane.f32.xlu0 %v764
  %v1262 = vpop.xlane.xlu0 %1261
  %1263 = vadd.xlane.f32.xlu0 %v765
  %v1264 = vpop.xlane.xlu0 %1263
  %1265 = vadd.xlane.f32.xlu0 %v766
  %v1266 = vpop.xlane.xlu0 %1265
  %1267 = vadd.xlane.f32.xlu0 %v767
  %v1268 = vpop.xlane.xlu0 %1267
  %1269 = vadd.xlane.f32.xlu0 %v768
  %v1270 = vpop.xlane.xlu0 %1269
  %1271 = vadd.xlane.f32.xlu0 %v769
  %v1272 = vpop.xlane.xlu0 %1271
  %1273 = vadd.xlane.f32.xlu0 %v770
  %v1274 = vpop.xlane.xlu0 %1273
  %1275 = vadd.xlane.f32.xlu0 %v771
  %v1276 = vpop.xlane.xlu0 %1275
  %1277 = vadd.xlane.f32.xlu0 %v772
  %v1278 = vpop.xlane.xlu0 %1277
  %1279 = vadd.xlane.f32.xlu0 %v773
  %v1280 = vpop.xlane.xlu0 %1279
  %1281 = vadd.xlane.f32.xlu0 %v774
  %v1282 = vpop.xlane.xlu0 %1281
  %1283 = vadd.xlane.f32.xlu0 %v775
  %v1284 = vpop.xlane.xlu0 %1283
  %1285 = vadd.xlane.f32.xlu0 %v776
  %v1286 = vpop.xlane.xlu0 %1285
  %1287 = vadd.xlane.f32.xlu0 %v777
  %v1288 = vpop.xlane.xlu0 %1287
  %1289 = vadd.xlane.f32.xlu0 %v778
  %v1290 = vpop.xlane.xlu0 %1289
  %v1307 = vlaneseq
  %v1308 = vand.u32 %v1307, 127
  %v1309 = vlaneseq
  %v1310 = vshrl.u32 %v1309, 7
  %v1311 = vsub.s32 %v1308, %v1310
  %v1312 = vrot.slane %v780, %v1311
  %v1313 = vadd.s32 %v1308, 4294967288
  %v1314 = vlaneseq
  %v1315 = vshrl.u32 %v1314, 7
  %v1316 = vsub.s32 %v1313, %v1315
  %v1317 = vrot.slane %v782, %v1316
  %vm1318 = vcmask 130112
  %v1319 = vsel %vm1318, %v1317, %v1312
  %v1320 = vadd.s32 %v1308, 4294967280
  %v1321 = vlaneseq
  %v1322 = vshrl.u32 %v1321, 7
  %v1323 = vsub.s32 %v1320, %v1322
  %v1324 = vrot.slane %v784, %v1323
  %vm1325 = vcmask 195712
  %v1326 = vsel %vm1325, %v1324, %v1319
  %v1327 = vadd.s32 %v1308, 4294967272
  %v1328 = vlaneseq
  %v1329 = vshrl.u32 %v1328, 7
  %v1330 = vsub.s32 %v1327, %v1329
  %v1331 = vrot.slane %v786, %v1330
  %vm1332 = vcmask 261312
  %v1333 = vsel %vm1332, %v1331, %v1326
  %v1334 = vadd.s32 %v1308, 4294967264
  %v1335 = vlaneseq
  %v1336 = vshrl.u32 %v1335, 7
  %v1337 = vsub.s32 %v1334, %v1336
  %v1338 = vrot.slane %v788, %v1337
  %vm1339 = vcmask 326912
  %v1340 = vsel %vm1339, %v1338, %v1333
  %v1341 = vadd.s32 %v1308, 4294967256
  %v1342 = vlaneseq
  %v1343 = vshrl.u32 %v1342, 7
  %v1344 = vsub.s32 %v1341, %v1343
  %v1345 = vrot.slane %v790, %v1344
  %vm1346 = vcmask 392512
  %v1347 = vsel %vm1346, %v1345, %v1340
  %v1348 = vadd.s32 %v1308, 4294967248
  %v1349 = vlaneseq
  %v1350 = vshrl.u32 %v1349, 7
  %v1351 = vsub.s32 %v1348, %v1350
  %v1352 = vrot.slane %v792, %v1351
  %vm1353 = vcmask 458112
  %v1354 = vsel %vm1353, %v1352, %v1347
  %v1355 = vadd.s32 %v1308, 4294967240
  %v1356 = vlaneseq
  %v1357 = vshrl.u32 %v1356, 7
  %v1358 = vsub.s32 %v1355, %v1357
  %v1359 = vrot.slane %v794, %v1358
  %vm1360 = vcmask 523712
  %v1361 = vsel %vm1360, %v1359, %v1354
  %v1362 = vadd.s32 %v1308, 4294967232
  %v1363 = vlaneseq
  %v1364 = vshrl.u32 %v1363, 7
  %v1365 = vsub.s32 %v1362, %v1364
  %v1366 = vrot.slane %v796, %v1365
  %vm1367 = vcmask 589312
  %v1368 = vsel %vm1367, %v1366, %v1361
  %v1369 = vadd.s32 %v1308, 4294967224
  %v1370 = vlaneseq
  %v1371 = vshrl.u32 %v1370, 7
  %v1372 = vsub.s32 %v1369, %v1371
  %v1373 = vrot.slane %v798, %v1372
  %vm1374 = vcmask 654912
  %v1375 = vsel %vm1374, %v1373, %v1368
  %v1376 = vadd.s32 %v1308, 4294967216
  %v1377 = vlaneseq
  %v1378 = vshrl.u32 %v1377, 7
  %v1379 = vsub.s32 %v1376, %v1378
  %v1380 = vrot.slane %v800, %v1379
  %vm1381 = vcmask 720512
  %v1382 = vsel %vm1381, %v1380, %v1375
  %v1383 = vadd.s32 %v1308, 4294967208
  %v1384 = vlaneseq
  %v1385 = vshrl.u32 %v1384, 7
  %v1386 = vsub.s32 %v1383, %v1385
  %v1387 = vrot.slane %v802, %v1386
  %vm1388 = vcmask 786112
  %v1389 = vsel %vm1388, %v1387, %v1382
  %v1390 = vadd.s32 %v1308, 4294967200
  %v1391 = vlaneseq
  %v1392 = vshrl.u32 %v1391, 7
  %v1393 = vsub.s32 %v1390, %v1392
  %v1394 = vrot.slane %v804, %v1393
  %vm1395 = vcmask 851712
  %v1396 = vsel %vm1395, %v1394, %v1389
  %v1397 = vadd.s32 %v1308, 4294967192
  %v1398 = vlaneseq
  %v1399 = vshrl.u32 %v1398, 7
  %v1400 = vsub.s32 %v1397, %v1399
  %v1401 = vrot.slane %v806, %v1400
  %vm1402 = vcmask 917312
  %v1403 = vsel %vm1402, %v1401, %v1396
  %v1404 = vadd.s32 %v1308, 4294967184
  %v1405 = vlaneseq
  %v1406 = vshrl.u32 %v1405, 7
  %v1407 = vsub.s32 %v1404, %v1406
  %v1408 = vrot.slane %v808, %v1407
  %vm1409 = vcmask 982912
  %v1410 = vsel %vm1409, %v1408, %v1403
  %v1411 = vadd.s32 %v1308, 4294967176
  %v1412 = vlaneseq
  %v1413 = vshrl.u32 %v1412, 7
  %v1414 = vsub.s32 %v1411, %v1413
  %v1415 = vrot.slane %v810, %v1414
  %vm1416 = vcmask 1048512
  %v1417 = vsel %vm1416, %v1415, %v1410
  %1418 = vst [vmem:[%s2] ss:$16 sm:$0x1] %v1417
  %1419 = vst [vmem:[%s2] ss:$16 sm:$0x0] %v1417
  %1420 = vst [vmem:[%s2] ss:$16 sm:$0x0] %v1417
  %1421 = vst [vmem:[%s2] ss:$16 sm:$0x0] %v1417
  %v1438 = vlaneseq
  %v1439 = vshrl.u32 %v1438, 7
  %v1440 = vsub.s32 %v1308, %v1439
  %v1441 = vrot.slane %v812, %v1440
  %v1442 = vlaneseq
  %v1443 = vshrl.u32 %v1442, 7
  %v1444 = vsub.s32 %v1313, %v1443
  %v1445 = vrot.slane %v814, %v1444
  %v1446 = vsel %vm1318, %v1445, %v1441
  %v1447 = vlaneseq
  %v1448 = vshrl.u32 %v1447, 7
  %v1449 = vsub.s32 %v1320, %v1448
  %v1450 = vrot.slane %v816, %v1449
  %v1451 = vsel %vm1325, %v1450, %v1446
  %v1452 = vlaneseq
  %v1453 = vshrl.u32 %v1452, 7
  %v1454 = vsub.s32 %v1327, %v1453
  %v1455 = vrot.slane %v818, %v1454
  %v1456 = vsel %vm1332, %v1455, %v1451
  %v1457 = vlaneseq
  %v1458 = vshrl.u32 %v1457, 7
  %v1459 = vsub.s32 %v1334, %v1458
  %v1460 = vrot.slane %v820, %v1459
  %v1461 = vsel %vm1339, %v1460, %v1456
  %v1462 = vlaneseq
  %v1463 = vshrl.u32 %v1462, 7
  %v1464 = vsub.s32 %v1341, %v1463
  %v1465 = vrot.slane %v822, %v1464
  %v1466 = vsel %vm1346, %v1465, %v1461
  %v1467 = vlaneseq
  %v1468 = vshrl.u32 %v1467, 7
  %v1469 = vsub.s32 %v1348, %v1468
  %v1470 = vrot.slane %v824, %v1469
  %v1471 = vsel %vm1353, %v1470, %v1466
  %v1472 = vlaneseq
  %v1473 = vshrl.u32 %v1472, 7
  %v1474 = vsub.s32 %v1355, %v1473
  %v1475 = vrot.slane %v826, %v1474
  %v1476 = vsel %vm1360, %v1475, %v1471
  %v1477 = vlaneseq
  %v1478 = vshrl.u32 %v1477, 7
  %v1479 = vsub.s32 %v1362, %v1478
  %v1480 = vrot.slane %v828, %v1479
  %v1481 = vsel %vm1367, %v1480, %v1476
  %v1482 = vlaneseq
  %v1483 = vshrl.u32 %v1482, 7
  %v1484 = vsub.s32 %v1369, %v1483
  %v1485 = vrot.slane %v830, %v1484
  %v1486 = vsel %vm1374, %v1485, %v1481
  %v1487 = vlaneseq
  %v1488 = vshrl.u32 %v1487, 7
  %v1489 = vsub.s32 %v1376, %v1488
  %v1490 = vrot.slane %v832, %v1489
  %v1491 = vsel %vm1381, %v1490, %v1486
  %v1492 = vlaneseq
  %v1493 = vshrl.u32 %v1492, 7
  %v1494 = vsub.s32 %v1383, %v1493
  %v1495 = vrot.slane %v834, %v1494
  %v1496 = vsel %vm1388, %v1495, %v1491
  %v1497 = vlaneseq
  %v1498 = vshrl.u32 %v1497, 7
  %v1499 = vsub.s32 %v1390, %v1498
  %v1500 = vrot.slane %v836, %v1499
  %v1501 = vsel %vm1395, %v1500, %v1496
  %v1502 = vlaneseq
  %v1503 = vshrl.u32 %v1502, 7
  %v1504 = vsub.s32 %v1397, %v1503
  %v1505 = vrot.slane %v838, %v1504
  %v1506 = vsel %vm1402, %v1505, %v1501
  %v1507 = vlaneseq
  %v1508 = vshrl.u32 %v1507, 7
  %v1509 = vsub.s32 %v1404, %v1508
  %v1510 = vrot.slane %v840, %v1509
  %v1511 = vsel %vm1409, %v1510, %v1506
  %v1512 = vlaneseq
  %v1513 = vshrl.u32 %v1512, 7
  %v1514 = vsub.s32 %v1411, %v1513
  %v1515 = vrot.slane %v842, %v1514
  %v1516 = vsel %vm1416, %v1515, %v1511
  %s1517 = scalar_lea.vmem %s2, 1
  %1518 = vst [vmem:[%s1517] ss:$16 sm:$0x1] %v1516
  %1519 = vst [vmem:[%s1517] ss:$16 sm:$0x0] %v1516
  %1520 = vst [vmem:[%s1517] ss:$16 sm:$0x0] %v1516
  %1521 = vst [vmem:[%s1517] ss:$16 sm:$0x0] %v1516
  %v1538 = vlaneseq
  %v1539 = vshrl.u32 %v1538, 7
  %v1540 = vsub.s32 %v1308, %v1539
  %v1541 = vrot.slane %v844, %v1540
  %v1542 = vlaneseq
  %v1543 = vshrl.u32 %v1542, 7
  %v1544 = vsub.s32 %v1313, %v1543
  %v1545 = vrot.slane %v846, %v1544
  %v1546 = vsel %vm1318, %v1545, %v1541
  %v1547 = vlaneseq
  %v1548 = vshrl.u32 %v1547, 7
  %v1549 = vsub.s32 %v1320, %v1548
  %v1550 = vrot.slane %v848, %v1549
  %v1551 = vsel %vm1325, %v1550, %v1546
  %v1552 = vlaneseq
  %v1553 = vshrl.u32 %v1552, 7
  %v1554 = vsub.s32 %v1327, %v1553
  %v1555 = vrot.slane %v850, %v1554
  %v1556 = vsel %vm1332, %v1555, %v1551
  %v1557 = vlaneseq
  %v1558 = vshrl.u32 %v1557, 7
  %v1559 = vsub.s32 %v1334, %v1558
  %v1560 = vrot.slane %v852, %v1559
  %v1561 = vsel %vm1339, %v1560, %v1556
  %v1562 = vlaneseq
  %v1563 = vshrl.u32 %v1562, 7
  %v1564 = vsub.s32 %v1341, %v1563
  %v1565 = vrot.slane %v854, %v1564
  %v1566 = vsel %vm1346, %v1565, %v1561
  %v1567 = vlaneseq
  %v1568 = vshrl.u32 %v1567, 7
  %v1569 = vsub.s32 %v1348, %v1568
  %v1570 = vrot.slane %v856, %v1569
  %v1571 = vsel %vm1353, %v1570, %v1566
  %v1572 = vlaneseq
  %v1573 = vshrl.u32 %v1572, 7
  %v1574 = vsub.s32 %v1355, %v1573
  %v1575 = vrot.slane %v858, %v1574
  %v1576 = vsel %vm1360, %v1575, %v1571
  %v1577 = vlaneseq
  %v1578 = vshrl.u32 %v1577, 7
  %v1579 = vsub.s32 %v1362, %v1578
  %v1580 = vrot.slane %v860, %v1579
  %v1581 = vsel %vm1367, %v1580, %v1576
  %v1582 = vlaneseq
  %v1583 = vshrl.u32 %v1582, 7
  %v1584 = vsub.s32 %v1369, %v1583
  %v1585 = vrot.slane %v862, %v1584
  %v1586 = vsel %vm1374, %v1585, %v1581
  %v1587 = vlaneseq
  %v1588 = vshrl.u32 %v1587, 7
  %v1589 = vsub.s32 %v1376, %v1588
  %v1590 = vrot.slane %v864, %v1589
  %v1591 = vsel %vm1381, %v1590, %v1586
  %v1592 = vlaneseq
  %v1593 = vshrl.u32 %v1592, 7
  %v1594 = vsub.s32 %v1383, %v1593
  %v1595 = vrot.slane %v866, %v1594
  %v1596 = vsel %vm1388, %v1595, %v1591
  %v1597 = vlaneseq
  %v1598 = vshrl.u32 %v1597, 7
  %v1599 = vsub.s32 %v1390, %v1598
  %v1600 = vrot.slane %v868, %v1599
  %v1601 = vsel %vm1395, %v1600, %v1596
  %v1602 = vlaneseq
  %v1603 = vshrl.u32 %v1602, 7
  %v1604 = vsub.s32 %v1397, %v1603
  %v1605 = vrot.slane %v870, %v1604
  %v1606 = vsel %vm1402, %v1605, %v1601
  %v1607 = vlaneseq
  %v1608 = vshrl.u32 %v1607, 7
  %v1609 = vsub.s32 %v1404, %v1608
  %v1610 = vrot.slane %v872, %v1609
  %v1611 = vsel %vm1409, %v1610, %v1606
  %v1612 = vlaneseq
  %v1613 = vshrl.u32 %v1612, 7
  %v1614 = vsub.s32 %v1411, %v1613
  %v1615 = vrot.slane %v874, %v1614
  %v1616 = vsel %vm1416, %v1615, %v1611
  %s1617 = scalar_lea.vmem %s2, 2
  %1618 = vst [vmem:[%s1617] ss:$16 sm:$0x1] %v1616
  %1619 = vst [vmem:[%s1617] ss:$16 sm:$0x0] %v1616
  %1620 = vst [vmem:[%s1617] ss:$16 sm:$0x0] %v1616
  %1621 = vst [vmem:[%s1617] ss:$16 sm:$0x0] %v1616
  %v1638 = vlaneseq
  %v1639 = vshrl.u32 %v1638, 7
  %v1640 = vsub.s32 %v1308, %v1639
  %v1641 = vrot.slane %v876, %v1640
  %v1642 = vlaneseq
  %v1643 = vshrl.u32 %v1642, 7
  %v1644 = vsub.s32 %v1313, %v1643
  %v1645 = vrot.slane %v878, %v1644
  %v1646 = vsel %vm1318, %v1645, %v1641
  %v1647 = vlaneseq
  %v1648 = vshrl.u32 %v1647, 7
  %v1649 = vsub.s32 %v1320, %v1648
  %v1650 = vrot.slane %v880, %v1649
  %v1651 = vsel %vm1325, %v1650, %v1646
  %v1652 = vlaneseq
  %v1653 = vshrl.u32 %v1652, 7
  %v1654 = vsub.s32 %v1327, %v1653
  %v1655 = vrot.slane %v882, %v1654
  %v1656 = vsel %vm1332, %v1655, %v1651
  %v1657 = vlaneseq
  %v1658 = vshrl.u32 %v1657, 7
  %v1659 = vsub.s32 %v1334, %v1658
  %v1660 = vrot.slane %v884, %v1659
  %v1661 = vsel %vm1339, %v1660, %v1656
  %v1662 = vlaneseq
  %v1663 = vshrl.u32 %v1662, 7
  %v1664 = vsub.s32 %v1341, %v1663
  %v1665 = vrot.slane %v886, %v1664
  %v1666 = vsel %vm1346, %v1665, %v1661
  %v1667 = vlaneseq
  %v1668 = vshrl.u32 %v1667, 7
  %v1669 = vsub.s32 %v1348, %v1668
  %v1670 = vrot.slane %v888, %v1669
  %v1671 = vsel %vm1353, %v1670, %v1666
  %v1672 = vlaneseq
  %v1673 = vshrl.u32 %v1672, 7
  %v1674 = vsub.s32 %v1355, %v1673
  %v1675 = vrot.slane %v890, %v1674
  %v1676 = vsel %vm1360, %v1675, %v1671
  %v1677 = vlaneseq
  %v1678 = vshrl.u32 %v1677, 7
  %v1679 = vsub.s32 %v1362, %v1678
  %v1680 = vrot.slane %v892, %v1679
  %v1681 = vsel %vm1367, %v1680, %v1676
  %v1682 = vlaneseq
  %v1683 = vshrl.u32 %v1682, 7
  %v1684 = vsub.s32 %v1369, %v1683
  %v1685 = vrot.slane %v894, %v1684
  %v1686 = vsel %vm1374, %v1685, %v1681
  %v1687 = vlaneseq
  %v1688 = vshrl.u32 %v1687, 7
  %v1689 = vsub.s32 %v1376, %v1688
  %v1690 = vrot.slane %v896, %v1689
  %v1691 = vsel %vm1381, %v1690, %v1686
  %v1692 = vlaneseq
  %v1693 = vshrl.u32 %v1692, 7
  %v1694 = vsub.s32 %v1383, %v1693
  %v1695 = vrot.slane %v898, %v1694
  %v1696 = vsel %vm1388, %v1695, %v1691
  %v1697 = vlaneseq
  %v1698 = vshrl.u32 %v1697, 7
  %v1699 = vsub.s32 %v1390, %v1698
  %v1700 = vrot.slane %v900, %v1699
  %v1701 = vsel %vm1395, %v1700, %v1696
  %v1702 = vlaneseq
  %v1703 = vshrl.u32 %v1702, 7
  %v1704 = vsub.s32 %v1397, %v1703
  %v1705 = vrot.slane %v902, %v1704
  %v1706 = vsel %vm1402, %v1705, %v1701
  %v1707 = vlaneseq
  %v1708 = vshrl.u32 %v1707, 7
  %v1709 = vsub.s32 %v1404, %v1708
  %v1710 = vrot.slane %v904, %v1709
  %v1711 = vsel %vm1409, %v1710, %v1706
  %v1712 = vlaneseq
  %v1713 = vshrl.u32 %v1712, 7
  %v1714 = vsub.s32 %v1411, %v1713
  %v1715 = vrot.slane %v906, %v1714
  %v1716 = vsel %vm1416, %v1715, %v1711
  %s1717 = scalar_lea.vmem %s2, 3
  %1718 = vst [vmem:[%s1717] ss:$16 sm:$0x1] %v1716
  %1719 = vst [vmem:[%s1717] ss:$16 sm:$0x0] %v1716
  %1720 = vst [vmem:[%s1717] ss:$16 sm:$0x0] %v1716
  %1721 = vst [vmem:[%s1717] ss:$16 sm:$0x0] %v1716
  %v1738 = vlaneseq
  %v1739 = vshrl.u32 %v1738, 7
  %v1740 = vsub.s32 %v1308, %v1739
  %v1741 = vrot.slane %v908, %v1740
  %v1742 = vlaneseq
  %v1743 = vshrl.u32 %v1742, 7
  %v1744 = vsub.s32 %v1313, %v1743
  %v1745 = vrot.slane %v910, %v1744
  %v1746 = vsel %vm1318, %v1745, %v1741
  %v1747 = vlaneseq
  %v1748 = vshrl.u32 %v1747, 7
  %v1749 = vsub.s32 %v1320, %v1748
  %v1750 = vrot.slane %v912, %v1749
  %v1751 = vsel %vm1325, %v1750, %v1746
  %v1752 = vlaneseq
  %v1753 = vshrl.u32 %v1752, 7
  %v1754 = vsub.s32 %v1327, %v1753
  %v1755 = vrot.slane %v914, %v1754
  %v1756 = vsel %vm1332, %v1755, %v1751
  %v1757 = vlaneseq
  %v1758 = vshrl.u32 %v1757, 7
  %v1759 = vsub.s32 %v1334, %v1758
  %v1760 = vrot.slane %v916, %v1759
  %v1761 = vsel %vm1339, %v1760, %v1756
  %v1762 = vlaneseq
  %v1763 = vshrl.u32 %v1762, 7
  %v1764 = vsub.s32 %v1341, %v1763
  %v1765 = vrot.slane %v918, %v1764
  %v1766 = vsel %vm1346, %v1765, %v1761
  %v1767 = vlaneseq
  %v1768 = vshrl.u32 %v1767, 7
  %v1769 = vsub.s32 %v1348, %v1768
  %v1770 = vrot.slane %v920, %v1769
  %v1771 = vsel %vm1353, %v1770, %v1766
  %v1772 = vlaneseq
  %v1773 = vshrl.u32 %v1772, 7
  %v1774 = vsub.s32 %v1355, %v1773
  %v1775 = vrot.slane %v922, %v1774
  %v1776 = vsel %vm1360, %v1775, %v1771
  %v1777 = vlaneseq
  %v1778 = vshrl.u32 %v1777, 7
  %v1779 = vsub.s32 %v1362, %v1778
  %v1780 = vrot.slane %v924, %v1779
  %v1781 = vsel %vm1367, %v1780, %v1776
  %v1782 = vlaneseq
  %v1783 = vshrl.u32 %v1782, 7
  %v1784 = vsub.s32 %v1369, %v1783
  %v1785 = vrot.slane %v926, %v1784
  %v1786 = vsel %vm1374, %v1785, %v1781
  %v1787 = vlaneseq
  %v1788 = vshrl.u32 %v1787, 7
  %v1789 = vsub.s32 %v1376, %v1788
  %v1790 = vrot.slane %v928, %v1789
  %v1791 = vsel %vm1381, %v1790, %v1786
  %v1792 = vlaneseq
  %v1793 = vshrl.u32 %v1792, 7
  %v1794 = vsub.s32 %v1383, %v1793
  %v1795 = vrot.slane %v930, %v1794
  %v1796 = vsel %vm1388, %v1795, %v1791
  %v1797 = vlaneseq
  %v1798 = vshrl.u32 %v1797, 7
  %v1799 = vsub.s32 %v1390, %v1798
  %v1800 = vrot.slane %v932, %v1799
  %v1801 = vsel %vm1395, %v1800, %v1796
  %v1802 = vlaneseq
  %v1803 = vshrl.u32 %v1802, 7
  %v1804 = vsub.s32 %v1397, %v1803
  %v1805 = vrot.slane %v934, %v1804
  %v1806 = vsel %vm1402, %v1805, %v1801
  %v1807 = vlaneseq
  %v1808 = vshrl.u32 %v1807, 7
  %v1809 = vsub.s32 %v1404, %v1808
  %v1810 = vrot.slane %v936, %v1809
  %v1811 = vsel %vm1409, %v1810, %v1806
  %v1812 = vlaneseq
  %v1813 = vshrl.u32 %v1812, 7
  %v1814 = vsub.s32 %v1411, %v1813
  %v1815 = vrot.slane %v938, %v1814
  %v1816 = vsel %vm1416, %v1815, %v1811
  %s1817 = scalar_lea.vmem %s2, 4
  %1818 = vst [vmem:[%s1817] ss:$16 sm:$0x1] %v1816
  %1819 = vst [vmem:[%s1817] ss:$16 sm:$0x0] %v1816
  %1820 = vst [vmem:[%s1817] ss:$16 sm:$0x0] %v1816
  %1821 = vst [vmem:[%s1817] ss:$16 sm:$0x0] %v1816
  %v1838 = vlaneseq
  %v1839 = vshrl.u32 %v1838, 7
  %v1840 = vsub.s32 %v1308, %v1839
  %v1841 = vrot.slane %v940, %v1840
  %v1842 = vlaneseq
  %v1843 = vshrl.u32 %v1842, 7
  %v1844 = vsub.s32 %v1313, %v1843
  %v1845 = vrot.slane %v942, %v1844
  %v1846 = vsel %vm1318, %v1845, %v1841
  %v1847 = vlaneseq
  %v1848 = vshrl.u32 %v1847, 7
  %v1849 = vsub.s32 %v1320, %v1848
  %v1850 = vrot.slane %v944, %v1849
  %v1851 = vsel %vm1325, %v1850, %v1846
  %v1852 = vlaneseq
  %v1853 = vshrl.u32 %v1852, 7
  %v1854 = vsub.s32 %v1327, %v1853
  %v1855 = vrot.slane %v946, %v1854
  %v1856 = vsel %vm1332, %v1855, %v1851
  %v1857 = vlaneseq
  %v1858 = vshrl.u32 %v1857, 7
  %v1859 = vsub.s32 %v1334, %v1858
  %v1860 = vrot.slane %v948, %v1859
  %v1861 = vsel %vm1339, %v1860, %v1856
  %v1862 = vlaneseq
  %v1863 = vshrl.u32 %v1862, 7
  %v1864 = vsub.s32 %v1341, %v1863
  %v1865 = vrot.slane %v950, %v1864
  %v1866 = vsel %vm1346, %v1865, %v1861
  %v1867 = vlaneseq
  %v1868 = vshrl.u32 %v1867, 7
  %v1869 = vsub.s32 %v1348, %v1868
  %v1870 = vrot.slane %v952, %v1869
  %v1871 = vsel %vm1353, %v1870, %v1866
  %v1872 = vlaneseq
  %v1873 = vshrl.u32 %v1872, 7
  %v1874 = vsub.s32 %v1355, %v1873
  %v1875 = vrot.slane %v954, %v1874
  %v1876 = vsel %vm1360, %v1875, %v1871
  %v1877 = vlaneseq
  %v1878 = vshrl.u32 %v1877, 7
  %v1879 = vsub.s32 %v1362, %v1878
  %v1880 = vrot.slane %v956, %v1879
  %v1881 = vsel %vm1367, %v1880, %v1876
  %v1882 = vlaneseq
  %v1883 = vshrl.u32 %v1882, 7
  %v1884 = vsub.s32 %v1369, %v1883
  %v1885 = vrot.slane %v958, %v1884
  %v1886 = vsel %vm1374, %v1885, %v1881
  %v1887 = vlaneseq
  %v1888 = vshrl.u32 %v1887, 7
  %v1889 = vsub.s32 %v1376, %v1888
  %v1890 = vrot.slane %v960, %v1889
  %v1891 = vsel %vm1381, %v1890, %v1886
  %v1892 = vlaneseq
  %v1893 = vshrl.u32 %v1892, 7
  %v1894 = vsub.s32 %v1383, %v1893
  %v1895 = vrot.slane %v962, %v1894
  %v1896 = vsel %vm1388, %v1895, %v1891
  %v1897 = vlaneseq
  %v1898 = vshrl.u32 %v1897, 7
  %v1899 = vsub.s32 %v1390, %v1898
  %v1900 = vrot.slane %v964, %v1899
  %v1901 = vsel %vm1395, %v1900, %v1896
  %v1902 = vlaneseq
  %v1903 = vshrl.u32 %v1902, 7
  %v1904 = vsub.s32 %v1397, %v1903
  %v1905 = vrot.slane %v966, %v1904
  %v1906 = vsel %vm1402, %v1905, %v1901
  %v1907 = vlaneseq
  %v1908 = vshrl.u32 %v1907, 7
  %v1909 = vsub.s32 %v1404, %v1908
  %v1910 = vrot.slane %v968, %v1909
  %v1911 = vsel %vm1409, %v1910, %v1906
  %v1912 = vlaneseq
  %v1913 = vshrl.u32 %v1912, 7
  %v1914 = vsub.s32 %v1411, %v1913
  %v1915 = vrot.slane %v970, %v1914
  %v1916 = vsel %vm1416, %v1915, %v1911
  %s1917 = scalar_lea.vmem %s2, 5
  %1918 = vst [vmem:[%s1917] ss:$16 sm:$0x1] %v1916
  %1919 = vst [vmem:[%s1917] ss:$16 sm:$0x0] %v1916
  %1920 = vst [vmem:[%s1917] ss:$16 sm:$0x0] %v1916
  %1921 = vst [vmem:[%s1917] ss:$16 sm:$0x0] %v1916
  %v1938 = vlaneseq
  %v1939 = vshrl.u32 %v1938, 7
  %v1940 = vsub.s32 %v1308, %v1939
  %v1941 = vrot.slane %v972, %v1940
  %v1942 = vlaneseq
  %v1943 = vshrl.u32 %v1942, 7
  %v1944 = vsub.s32 %v1313, %v1943
  %v1945 = vrot.slane %v974, %v1944
  %v1946 = vsel %vm1318, %v1945, %v1941
  %v1947 = vlaneseq
  %v1948 = vshrl.u32 %v1947, 7
  %v1949 = vsub.s32 %v1320, %v1948
  %v1950 = vrot.slane %v976, %v1949
  %v1951 = vsel %vm1325, %v1950, %v1946
  %v1952 = vlaneseq
  %v1953 = vshrl.u32 %v1952, 7
  %v1954 = vsub.s32 %v1327, %v1953
  %v1955 = vrot.slane %v978, %v1954
  %v1956 = vsel %vm1332, %v1955, %v1951
  %v1957 = vlaneseq
  %v1958 = vshrl.u32 %v1957, 7
  %v1959 = vsub.s32 %v1334, %v1958
  %v1960 = vrot.slane %v980, %v1959
  %v1961 = vsel %vm1339, %v1960, %v1956
  %v1962 = vlaneseq
  %v1963 = vshrl.u32 %v1962, 7
  %v1964 = vsub.s32 %v1341, %v1963
  %v1965 = vrot.slane %v982, %v1964
  %v1966 = vsel %vm1346, %v1965, %v1961
  %v1967 = vlaneseq
  %v1968 = vshrl.u32 %v1967, 7
  %v1969 = vsub.s32 %v1348, %v1968
  %v1970 = vrot.slane %v984, %v1969
  %v1971 = vsel %vm1353, %v1970, %v1966
  %v1972 = vlaneseq
  %v1973 = vshrl.u32 %v1972, 7
  %v1974 = vsub.s32 %v1355, %v1973
  %v1975 = vrot.slane %v986, %v1974
  %v1976 = vsel %vm1360, %v1975, %v1971
  %v1977 = vlaneseq
  %v1978 = vshrl.u32 %v1977, 7
  %v1979 = vsub.s32 %v1362, %v1978
  %v1980 = vrot.slane %v988, %v1979
  %v1981 = vsel %vm1367, %v1980, %v1976
  %v1982 = vlaneseq
  %v1983 = vshrl.u32 %v1982, 7
  %v1984 = vsub.s32 %v1369, %v1983
  %v1985 = vrot.slane %v990, %v1984
  %v1986 = vsel %vm1374, %v1985, %v1981
  %v1987 = vlaneseq
  %v1988 = vshrl.u32 %v1987, 7
  %v1989 = vsub.s32 %v1376, %v1988
  %v1990 = vrot.slane %v992, %v1989
  %v1991 = vsel %vm1381, %v1990, %v1986
  %v1992 = vlaneseq
  %v1993 = vshrl.u32 %v1992, 7
  %v1994 = vsub.s32 %v1383, %v1993
  %v1995 = vrot.slane %v994, %v1994
  %v1996 = vsel %vm1388, %v1995, %v1991
  %v1997 = vlaneseq
  %v1998 = vshrl.u32 %v1997, 7
  %v1999 = vsub.s32 %v1390, %v1998
  %v2000 = vrot.slane %v996, %v1999
  %v2001 = vsel %vm1395, %v2000, %v1996
  %v2002 = vlaneseq
  %v2003 = vshrl.u32 %v2002, 7
  %v2004 = vsub.s32 %v1397, %v2003
  %v2005 = vrot.slane %v998, %v2004
  %v2006 = vsel %vm1402, %v2005, %v2001
  %v2007 = vlaneseq
  %v2008 = vshrl.u32 %v2007, 7
  %v2009 = vsub.s32 %v1404, %v2008
  %v2010 = vrot.slane %v1000, %v2009
  %v2011 = vsel %vm1409, %v2010, %v2006
  %v2012 = vlaneseq
  %v2013 = vshrl.u32 %v2012, 7
  %v2014 = vsub.s32 %v1411, %v2013
  %v2015 = vrot.slane %v1002, %v2014
  %v2016 = vsel %vm1416, %v2015, %v2011
  %s2017 = scalar_lea.vmem %s2, 6
  %2018 = vst [vmem:[%s2017] ss:$16 sm:$0x1] %v2016
  %2019 = vst [vmem:[%s2017] ss:$16 sm:$0x0] %v2016
  %2020 = vst [vmem:[%s2017] ss:$16 sm:$0x0] %v2016
  %2021 = vst [vmem:[%s2017] ss:$16 sm:$0x0] %v2016
  %v2038 = vlaneseq
  %v2039 = vshrl.u32 %v2038, 7
  %v2040 = vsub.s32 %v1308, %v2039
  %v2041 = vrot.slane %v1004, %v2040
  %v2042 = vlaneseq
  %v2043 = vshrl.u32 %v2042, 7
  %v2044 = vsub.s32 %v1313, %v2043
  %v2045 = vrot.slane %v1006, %v2044
  %v2046 = vsel %vm1318, %v2045, %v2041
  %v2047 = vlaneseq
  %v2048 = vshrl.u32 %v2047, 7
  %v2049 = vsub.s32 %v1320, %v2048
  %v2050 = vrot.slane %v1008, %v2049
  %v2051 = vsel %vm1325, %v2050, %v2046
  %v2052 = vlaneseq
  %v2053 = vshrl.u32 %v2052, 7
  %v2054 = vsub.s32 %v1327, %v2053
  %v2055 = vrot.slane %v1010, %v2054
  %v2056 = vsel %vm1332, %v2055, %v2051
  %v2057 = vlaneseq
  %v2058 = vshrl.u32 %v2057, 7
  %v2059 = vsub.s32 %v1334, %v2058
  %v2060 = vrot.slane %v1012, %v2059
  %v2061 = vsel %vm1339, %v2060, %v2056
  %v2062 = vlaneseq
  %v2063 = vshrl.u32 %v2062, 7
  %v2064 = vsub.s32 %v1341, %v2063
  %v2065 = vrot.slane %v1014, %v2064
  %v2066 = vsel %vm1346, %v2065, %v2061
  %v2067 = vlaneseq
  %v2068 = vshrl.u32 %v2067, 7
  %v2069 = vsub.s32 %v1348, %v2068
  %v2070 = vrot.slane %v1016, %v2069
  %v2071 = vsel %vm1353, %v2070, %v2066
  %v2072 = vlaneseq
  %v2073 = vshrl.u32 %v2072, 7
  %v2074 = vsub.s32 %v1355, %v2073
  %v2075 = vrot.slane %v1018, %v2074
  %v2076 = vsel %vm1360, %v2075, %v2071
  %v2077 = vlaneseq
  %v2078 = vshrl.u32 %v2077, 7
  %v2079 = vsub.s32 %v1362, %v2078
  %v2080 = vrot.slane %v1020, %v2079
  %v2081 = vsel %vm1367, %v2080, %v2076
  %v2082 = vlaneseq
  %v2083 = vshrl.u32 %v2082, 7
  %v2084 = vsub.s32 %v1369, %v2083
  %v2085 = vrot.slane %v1022, %v2084
  %v2086 = vsel %vm1374, %v2085, %v2081
  %v2087 = vlaneseq
  %v2088 = vshrl.u32 %v2087, 7
  %v2089 = vsub.s32 %v1376, %v2088
  %v2090 = vrot.slane %v1024, %v2089
  %v2091 = vsel %vm1381, %v2090, %v2086
  %v2092 = vlaneseq
  %v2093 = vshrl.u32 %v2092, 7
  %v2094 = vsub.s32 %v1383, %v2093
  %v2095 = vrot.slane %v1026, %v2094
  %v2096 = vsel %vm1388, %v2095, %v2091
  %v2097 = vlaneseq
  %v2098 = vshrl.u32 %v2097, 7
  %v2099 = vsub.s32 %v1390, %v2098
  %v2100 = vrot.slane %v1028, %v2099
  %v2101 = vsel %vm1395, %v2100, %v2096
  %v2102 = vlaneseq
  %v2103 = vshrl.u32 %v2102, 7
  %v2104 = vsub.s32 %v1397, %v2103
  %v2105 = vrot.slane %v1030, %v2104
  %v2106 = vsel %vm1402, %v2105, %v2101
  %v2107 = vlaneseq
  %v2108 = vshrl.u32 %v2107, 7
  %v2109 = vsub.s32 %v1404, %v2108
  %v2110 = vrot.slane %v1032, %v2109
  %v2111 = vsel %vm1409, %v2110, %v2106
  %v2112 = vlaneseq
  %v2113 = vshrl.u32 %v2112, 7
  %v2114 = vsub.s32 %v1411, %v2113
  %v2115 = vrot.slane %v1034, %v2114
  %v2116 = vsel %vm1416, %v2115, %v2111
  %s2117 = scalar_lea.vmem %s2, 7
  %2118 = vst [vmem:[%s2117] ss:$16 sm:$0x1] %v2116
  %2119 = vst [vmem:[%s2117] ss:$16 sm:$0x0] %v2116
  %2120 = vst [vmem:[%s2117] ss:$16 sm:$0x0] %v2116
  %2121 = vst [vmem:[%s2117] ss:$16 sm:$0x0] %v2116
  %v2138 = vlaneseq
  %v2139 = vshrl.u32 %v2138, 7
  %v2140 = vsub.s32 %v1308, %v2139
  %v2141 = vrot.slane %v1036, %v2140
  %v2142 = vlaneseq
  %v2143 = vshrl.u32 %v2142, 7
  %v2144 = vsub.s32 %v1313, %v2143
  %v2145 = vrot.slane %v1038, %v2144
  %v2146 = vsel %vm1318, %v2145, %v2141
  %v2147 = vlaneseq
  %v2148 = vshrl.u32 %v2147, 7
  %v2149 = vsub.s32 %v1320, %v2148
  %v2150 = vrot.slane %v1040, %v2149
  %v2151 = vsel %vm1325, %v2150, %v2146
  %v2152 = vlaneseq
  %v2153 = vshrl.u32 %v2152, 7
  %v2154 = vsub.s32 %v1327, %v2153
  %v2155 = vrot.slane %v1042, %v2154
  %v2156 = vsel %vm1332, %v2155, %v2151
  %v2157 = vlaneseq
  %v2158 = vshrl.u32 %v2157, 7
  %v2159 = vsub.s32 %v1334, %v2158
  %v2160 = vrot.slane %v1044, %v2159
  %v2161 = vsel %vm1339, %v2160, %v2156
  %v2162 = vlaneseq
  %v2163 = vshrl.u32 %v2162, 7
  %v2164 = vsub.s32 %v1341, %v2163
  %v2165 = vrot.slane %v1046, %v2164
  %v2166 = vsel %vm1346, %v2165, %v2161
  %v2167 = vlaneseq
  %v2168 = vshrl.u32 %v2167, 7
  %v2169 = vsub.s32 %v1348, %v2168
  %v2170 = vrot.slane %v1048, %v2169
  %v2171 = vsel %vm1353, %v2170, %v2166
  %v2172 = vlaneseq
  %v2173 = vshrl.u32 %v2172, 7
  %v2174 = vsub.s32 %v1355, %v2173
  %v2175 = vrot.slane %v1050, %v2174
  %v2176 = vsel %vm1360, %v2175, %v2171
  %v2177 = vlaneseq
  %v2178 = vshrl.u32 %v2177, 7
  %v2179 = vsub.s32 %v1362, %v2178
  %v2180 = vrot.slane %v1052, %v2179
  %v2181 = vsel %vm1367, %v2180, %v2176
  %v2182 = vlaneseq
  %v2183 = vshrl.u32 %v2182, 7
  %v2184 = vsub.s32 %v1369, %v2183
  %v2185 = vrot.slane %v1054, %v2184
  %v2186 = vsel %vm1374, %v2185, %v2181
  %v2187 = vlaneseq
  %v2188 = vshrl.u32 %v2187, 7
  %v2189 = vsub.s32 %v1376, %v2188
  %v2190 = vrot.slane %v1056, %v2189
  %v2191 = vsel %vm1381, %v2190, %v2186
  %v2192 = vlaneseq
  %v2193 = vshrl.u32 %v2192, 7
  %v2194 = vsub.s32 %v1383, %v2193
  %v2195 = vrot.slane %v1058, %v2194
  %v2196 = vsel %vm1388, %v2195, %v2191
  %v2197 = vlaneseq
  %v2198 = vshrl.u32 %v2197, 7
  %v2199 = vsub.s32 %v1390, %v2198
  %v2200 = vrot.slane %v1060, %v2199
  %v2201 = vsel %vm1395, %v2200, %v2196
  %v2202 = vlaneseq
  %v2203 = vshrl.u32 %v2202, 7
  %v2204 = vsub.s32 %v1397, %v2203
  %v2205 = vrot.slane %v1062, %v2204
  %v2206 = vsel %vm1402, %v2205, %v2201
  %v2207 = vlaneseq
  %v2208 = vshrl.u32 %v2207, 7
  %v2209 = vsub.s32 %v1404, %v2208
  %v2210 = vrot.slane %v1064, %v2209
  %v2211 = vsel %vm1409, %v2210, %v2206
  %v2212 = vlaneseq
  %v2213 = vshrl.u32 %v2212, 7
  %v2214 = vsub.s32 %v1411, %v2213
  %v2215 = vrot.slane %v1066, %v2214
  %v2216 = vsel %vm1416, %v2215, %v2211
  %s2217 = scalar_lea.vmem %s2, 8
  %2218 = vst [vmem:[%s2217] ss:$16 sm:$0x1] %v2216
  %2219 = vst [vmem:[%s2217] ss:$16 sm:$0x0] %v2216
  %2220 = vst [vmem:[%s2217] ss:$16 sm:$0x0] %v2216
  %2221 = vst [vmem:[%s2217] ss:$16 sm:$0x0] %v2216
  %v2238 = vlaneseq
  %v2239 = vshrl.u32 %v2238, 7
  %v2240 = vsub.s32 %v1308, %v2239
  %v2241 = vrot.slane %v1068, %v2240
  %v2242 = vlaneseq
  %v2243 = vshrl.u32 %v2242, 7
  %v2244 = vsub.s32 %v1313, %v2243
  %v2245 = vrot.slane %v1070, %v2244
  %v2246 = vsel %vm1318, %v2245, %v2241
  %v2247 = vlaneseq
  %v2248 = vshrl.u32 %v2247, 7
  %v2249 = vsub.s32 %v1320, %v2248
  %v2250 = vrot.slane %v1072, %v2249
  %v2251 = vsel %vm1325, %v2250, %v2246
  %v2252 = vlaneseq
  %v2253 = vshrl.u32 %v2252, 7
  %v2254 = vsub.s32 %v1327, %v2253
  %v2255 = vrot.slane %v1074, %v2254
  %v2256 = vsel %vm1332, %v2255, %v2251
  %v2257 = vlaneseq
  %v2258 = vshrl.u32 %v2257, 7
  %v2259 = vsub.s32 %v1334, %v2258
  %v2260 = vrot.slane %v1076, %v2259
  %v2261 = vsel %vm1339, %v2260, %v2256
  %v2262 = vlaneseq
  %v2263 = vshrl.u32 %v2262, 7
  %v2264 = vsub.s32 %v1341, %v2263
  %v2265 = vrot.slane %v1078, %v2264
  %v2266 = vsel %vm1346, %v2265, %v2261
  %v2267 = vlaneseq
  %v2268 = vshrl.u32 %v2267, 7
  %v2269 = vsub.s32 %v1348, %v2268
  %v2270 = vrot.slane %v1080, %v2269
  %v2271 = vsel %vm1353, %v2270, %v2266
  %v2272 = vlaneseq
  %v2273 = vshrl.u32 %v2272, 7
  %v2274 = vsub.s32 %v1355, %v2273
  %v2275 = vrot.slane %v1082, %v2274
  %v2276 = vsel %vm1360, %v2275, %v2271
  %v2277 = vlaneseq
  %v2278 = vshrl.u32 %v2277, 7
  %v2279 = vsub.s32 %v1362, %v2278
  %v2280 = vrot.slane %v1084, %v2279
  %v2281 = vsel %vm1367, %v2280, %v2276
  %v2282 = vlaneseq
  %v2283 = vshrl.u32 %v2282, 7
  %v2284 = vsub.s32 %v1369, %v2283
  %v2285 = vrot.slane %v1086, %v2284
  %v2286 = vsel %vm1374, %v2285, %v2281
  %v2287 = vlaneseq
  %v2288 = vshrl.u32 %v2287, 7
  %v2289 = vsub.s32 %v1376, %v2288
  %v2290 = vrot.slane %v1088, %v2289
  %v2291 = vsel %vm1381, %v2290, %v2286
  %v2292 = vlaneseq
  %v2293 = vshrl.u32 %v2292, 7
  %v2294 = vsub.s32 %v1383, %v2293
  %v2295 = vrot.slane %v1090, %v2294
  %v2296 = vsel %vm1388, %v2295, %v2291
  %v2297 = vlaneseq
  %v2298 = vshrl.u32 %v2297, 7
  %v2299 = vsub.s32 %v1390, %v2298
  %v2300 = vrot.slane %v1092, %v2299
  %v2301 = vsel %vm1395, %v2300, %v2296
  %v2302 = vlaneseq
  %v2303 = vshrl.u32 %v2302, 7
  %v2304 = vsub.s32 %v1397, %v2303
  %v2305 = vrot.slane %v1094, %v2304
  %v2306 = vsel %vm1402, %v2305, %v2301
  %v2307 = vlaneseq
  %v2308 = vshrl.u32 %v2307, 7
  %v2309 = vsub.s32 %v1404, %v2308
  %v2310 = vrot.slane %v1096, %v2309
  %v2311 = vsel %vm1409, %v2310, %v2306
  %v2312 = vlaneseq
  %v2313 = vshrl.u32 %v2312, 7
  %v2314 = vsub.s32 %v1411, %v2313
  %v2315 = vrot.slane %v1098, %v2314
  %v2316 = vsel %vm1416, %v2315, %v2311
  %s2317 = scalar_lea.vmem %s2, 9
  %2318 = vst [vmem:[%s2317] ss:$16 sm:$0x1] %v2316
  %2319 = vst [vmem:[%s2317] ss:$16 sm:$0x0] %v2316
  %2320 = vst [vmem:[%s2317] ss:$16 sm:$0x0] %v2316
  %2321 = vst [vmem:[%s2317] ss:$16 sm:$0x0] %v2316
  %v2338 = vlaneseq
  %v2339 = vshrl.u32 %v2338, 7
  %v2340 = vsub.s32 %v1308, %v2339
  %v2341 = vrot.slane %v1100, %v2340
  %v2342 = vlaneseq
  %v2343 = vshrl.u32 %v2342, 7
  %v2344 = vsub.s32 %v1313, %v2343
  %v2345 = vrot.slane %v1102, %v2344
  %v2346 = vsel %vm1318, %v2345, %v2341
  %v2347 = vlaneseq
  %v2348 = vshrl.u32 %v2347, 7
  %v2349 = vsub.s32 %v1320, %v2348
  %v2350 = vrot.slane %v1104, %v2349
  %v2351 = vsel %vm1325, %v2350, %v2346
  %v2352 = vlaneseq
  %v2353 = vshrl.u32 %v2352, 7
  %v2354 = vsub.s32 %v1327, %v2353
  %v2355 = vrot.slane %v1106, %v2354
  %v2356 = vsel %vm1332, %v2355, %v2351
  %v2357 = vlaneseq
  %v2358 = vshrl.u32 %v2357, 7
  %v2359 = vsub.s32 %v1334, %v2358
  %v2360 = vrot.slane %v1108, %v2359
  %v2361 = vsel %vm1339, %v2360, %v2356
  %v2362 = vlaneseq
  %v2363 = vshrl.u32 %v2362, 7
  %v2364 = vsub.s32 %v1341, %v2363
  %v2365 = vrot.slane %v1110, %v2364
  %v2366 = vsel %vm1346, %v2365, %v2361
  %v2367 = vlaneseq
  %v2368 = vshrl.u32 %v2367, 7
  %v2369 = vsub.s32 %v1348, %v2368
  %v2370 = vrot.slane %v1112, %v2369
  %v2371 = vsel %vm1353, %v2370, %v2366
  %v2372 = vlaneseq
  %v2373 = vshrl.u32 %v2372, 7
  %v2374 = vsub.s32 %v1355, %v2373
  %v2375 = vrot.slane %v1114, %v2374
  %v2376 = vsel %vm1360, %v2375, %v2371
  %v2377 = vlaneseq
  %v2378 = vshrl.u32 %v2377, 7
  %v2379 = vsub.s32 %v1362, %v2378
  %v2380 = vrot.slane %v1116, %v2379
  %v2381 = vsel %vm1367, %v2380, %v2376
  %v2382 = vlaneseq
  %v2383 = vshrl.u32 %v2382, 7
  %v2384 = vsub.s32 %v1369, %v2383
  %v2385 = vrot.slane %v1118, %v2384
  %v2386 = vsel %vm1374, %v2385, %v2381
  %v2387 = vlaneseq
  %v2388 = vshrl.u32 %v2387, 7
  %v2389 = vsub.s32 %v1376, %v2388
  %v2390 = vrot.slane %v1120, %v2389
  %v2391 = vsel %vm1381, %v2390, %v2386
  %v2392 = vlaneseq
  %v2393 = vshrl.u32 %v2392, 7
  %v2394 = vsub.s32 %v1383, %v2393
  %v2395 = vrot.slane %v1122, %v2394
  %v2396 = vsel %vm1388, %v2395, %v2391
  %v2397 = vlaneseq
  %v2398 = vshrl.u32 %v2397, 7
  %v2399 = vsub.s32 %v1390, %v2398
  %v2400 = vrot.slane %v1124, %v2399
  %v2401 = vsel %vm1395, %v2400, %v2396
  %v2402 = vlaneseq
  %v2403 = vshrl.u32 %v2402, 7
  %v2404 = vsub.s32 %v1397, %v2403
  %v2405 = vrot.slane %v1126, %v2404
  %v2406 = vsel %vm1402, %v2405, %v2401
  %v2407 = vlaneseq
  %v2408 = vshrl.u32 %v2407, 7
  %v2409 = vsub.s32 %v1404, %v2408
  %v2410 = vrot.slane %v1128, %v2409
  %v2411 = vsel %vm1409, %v2410, %v2406
  %v2412 = vlaneseq
  %v2413 = vshrl.u32 %v2412, 7
  %v2414 = vsub.s32 %v1411, %v2413
  %v2415 = vrot.slane %v1130, %v2414
  %v2416 = vsel %vm1416, %v2415, %v2411
  %s2417 = scalar_lea.vmem %s2, 10
  %2418 = vst [vmem:[%s2417] ss:$16 sm:$0x1] %v2416
  %2419 = vst [vmem:[%s2417] ss:$16 sm:$0x0] %v2416
  %2420 = vst [vmem:[%s2417] ss:$16 sm:$0x0] %v2416
  %2421 = vst [vmem:[%s2417] ss:$16 sm:$0x0] %v2416
  %v2438 = vlaneseq
  %v2439 = vshrl.u32 %v2438, 7
  %v2440 = vsub.s32 %v1308, %v2439
  %v2441 = vrot.slane %v1132, %v2440
  %v2442 = vlaneseq
  %v2443 = vshrl.u32 %v2442, 7
  %v2444 = vsub.s32 %v1313, %v2443
  %v2445 = vrot.slane %v1134, %v2444
  %v2446 = vsel %vm1318, %v2445, %v2441
  %v2447 = vlaneseq
  %v2448 = vshrl.u32 %v2447, 7
  %v2449 = vsub.s32 %v1320, %v2448
  %v2450 = vrot.slane %v1136, %v2449
  %v2451 = vsel %vm1325, %v2450, %v2446
  %v2452 = vlaneseq
  %v2453 = vshrl.u32 %v2452, 7
  %v2454 = vsub.s32 %v1327, %v2453
  %v2455 = vrot.slane %v1138, %v2454
  %v2456 = vsel %vm1332, %v2455, %v2451
  %v2457 = vlaneseq
  %v2458 = vshrl.u32 %v2457, 7
  %v2459 = vsub.s32 %v1334, %v2458
  %v2460 = vrot.slane %v1140, %v2459
  %v2461 = vsel %vm1339, %v2460, %v2456
  %v2462 = vlaneseq
  %v2463 = vshrl.u32 %v2462, 7
  %v2464 = vsub.s32 %v1341, %v2463
  %v2465 = vrot.slane %v1142, %v2464
  %v2466 = vsel %vm1346, %v2465, %v2461
  %v2467 = vlaneseq
  %v2468 = vshrl.u32 %v2467, 7
  %v2469 = vsub.s32 %v1348, %v2468
  %v2470 = vrot.slane %v1144, %v2469
  %v2471 = vsel %vm1353, %v2470, %v2466
  %v2472 = vlaneseq
  %v2473 = vshrl.u32 %v2472, 7
  %v2474 = vsub.s32 %v1355, %v2473
  %v2475 = vrot.slane %v1146, %v2474
  %v2476 = vsel %vm1360, %v2475, %v2471
  %v2477 = vlaneseq
  %v2478 = vshrl.u32 %v2477, 7
  %v2479 = vsub.s32 %v1362, %v2478
  %v2480 = vrot.slane %v1148, %v2479
  %v2481 = vsel %vm1367, %v2480, %v2476
  %v2482 = vlaneseq
  %v2483 = vshrl.u32 %v2482, 7
  %v2484 = vsub.s32 %v1369, %v2483
  %v2485 = vrot.slane %v1150, %v2484
  %v2486 = vsel %vm1374, %v2485, %v2481
  %v2487 = vlaneseq
  %v2488 = vshrl.u32 %v2487, 7
  %v2489 = vsub.s32 %v1376, %v2488
  %v2490 = vrot.slane %v1152, %v2489
  %v2491 = vsel %vm1381, %v2490, %v2486
  %v2492 = vlaneseq
  %v2493 = vshrl.u32 %v2492, 7
  %v2494 = vsub.s32 %v1383, %v2493
  %v2495 = vrot.slane %v1154, %v2494
  %v2496 = vsel %vm1388, %v2495, %v2491
  %v2497 = vlaneseq
  %v2498 = vshrl.u32 %v2497, 7
  %v2499 = vsub.s32 %v1390, %v2498
  %v2500 = vrot.slane %v1156, %v2499
  %v2501 = vsel %vm1395, %v2500, %v2496
  %v2502 = vlaneseq
  %v2503 = vshrl.u32 %v2502, 7
  %v2504 = vsub.s32 %v1397, %v2503
  %v2505 = vrot.slane %v1158, %v2504
  %v2506 = vsel %vm1402, %v2505, %v2501
  %v2507 = vlaneseq
  %v2508 = vshrl.u32 %v2507, 7
  %v2509 = vsub.s32 %v1404, %v2508
  %v2510 = vrot.slane %v1160, %v2509
  %v2511 = vsel %vm1409, %v2510, %v2506
  %v2512 = vlaneseq
  %v2513 = vshrl.u32 %v2512, 7
  %v2514 = vsub.s32 %v1411, %v2513
  %v2515 = vrot.slane %v1162, %v2514
  %v2516 = vsel %vm1416, %v2515, %v2511
  %s2517 = scalar_lea.vmem %s2, 11
  %2518 = vst [vmem:[%s2517] ss:$16 sm:$0x1] %v2516
  %2519 = vst [vmem:[%s2517] ss:$16 sm:$0x0] %v2516
  %2520 = vst [vmem:[%s2517] ss:$16 sm:$0x0] %v2516
  %2521 = vst [vmem:[%s2517] ss:$16 sm:$0x0] %v2516
  %v2538 = vlaneseq
  %v2539 = vshrl.u32 %v2538, 7
  %v2540 = vsub.s32 %v1308, %v2539
  %v2541 = vrot.slane %v1164, %v2540
  %v2542 = vlaneseq
  %v2543 = vshrl.u32 %v2542, 7
  %v2544 = vsub.s32 %v1313, %v2543
  %v2545 = vrot.slane %v1166, %v2544
  %v2546 = vsel %vm1318, %v2545, %v2541
  %v2547 = vlaneseq
  %v2548 = vshrl.u32 %v2547, 7
  %v2549 = vsub.s32 %v1320, %v2548
  %v2550 = vrot.slane %v1168, %v2549
  %v2551 = vsel %vm1325, %v2550, %v2546
  %v2552 = vlaneseq
  %v2553 = vshrl.u32 %v2552, 7
  %v2554 = vsub.s32 %v1327, %v2553
  %v2555 = vrot.slane %v1170, %v2554
  %v2556 = vsel %vm1332, %v2555, %v2551
  %v2557 = vlaneseq
  %v2558 = vshrl.u32 %v2557, 7
  %v2559 = vsub.s32 %v1334, %v2558
  %v2560 = vrot.slane %v1172, %v2559
  %v2561 = vsel %vm1339, %v2560, %v2556
  %v2562 = vlaneseq
  %v2563 = vshrl.u32 %v2562, 7
  %v2564 = vsub.s32 %v1341, %v2563
  %v2565 = vrot.slane %v1174, %v2564
  %v2566 = vsel %vm1346, %v2565, %v2561
  %v2567 = vlaneseq
  %v2568 = vshrl.u32 %v2567, 7
  %v2569 = vsub.s32 %v1348, %v2568
  %v2570 = vrot.slane %v1176, %v2569
  %v2571 = vsel %vm1353, %v2570, %v2566
  %v2572 = vlaneseq
  %v2573 = vshrl.u32 %v2572, 7
  %v2574 = vsub.s32 %v1355, %v2573
  %v2575 = vrot.slane %v1178, %v2574
  %v2576 = vsel %vm1360, %v2575, %v2571
  %v2577 = vlaneseq
  %v2578 = vshrl.u32 %v2577, 7
  %v2579 = vsub.s32 %v1362, %v2578
  %v2580 = vrot.slane %v1180, %v2579
  %v2581 = vsel %vm1367, %v2580, %v2576
  %v2582 = vlaneseq
  %v2583 = vshrl.u32 %v2582, 7
  %v2584 = vsub.s32 %v1369, %v2583
  %v2585 = vrot.slane %v1182, %v2584
  %v2586 = vsel %vm1374, %v2585, %v2581
  %v2587 = vlaneseq
  %v2588 = vshrl.u32 %v2587, 7
  %v2589 = vsub.s32 %v1376, %v2588
  %v2590 = vrot.slane %v1184, %v2589
  %v2591 = vsel %vm1381, %v2590, %v2586
  %v2592 = vlaneseq
  %v2593 = vshrl.u32 %v2592, 7
  %v2594 = vsub.s32 %v1383, %v2593
  %v2595 = vrot.slane %v1186, %v2594
  %v2596 = vsel %vm1388, %v2595, %v2591
  %v2597 = vlaneseq
  %v2598 = vshrl.u32 %v2597, 7
  %v2599 = vsub.s32 %v1390, %v2598
  %v2600 = vrot.slane %v1188, %v2599
  %v2601 = vsel %vm1395, %v2600, %v2596
  %v2602 = vlaneseq
  %v2603 = vshrl.u32 %v2602, 7
  %v2604 = vsub.s32 %v1397, %v2603
  %v2605 = vrot.slane %v1190, %v2604
  %v2606 = vsel %vm1402, %v2605, %v2601
  %v2607 = vlaneseq
  %v2608 = vshrl.u32 %v2607, 7
  %v2609 = vsub.s32 %v1404, %v2608
  %v2610 = vrot.slane %v1192, %v2609
  %v2611 = vsel %vm1409, %v2610, %v2606
  %v2612 = vlaneseq
  %v2613 = vshrl.u32 %v2612, 7
  %v2614 = vsub.s32 %v1411, %v2613
  %v2615 = vrot.slane %v1194, %v2614
  %v2616 = vsel %vm1416, %v2615, %v2611
  %s2617 = scalar_lea.vmem %s2, 12
  %2618 = vst [vmem:[%s2617] ss:$16 sm:$0x1] %v2616
  %2619 = vst [vmem:[%s2617] ss:$16 sm:$0x0] %v2616
  %2620 = vst [vmem:[%s2617] ss:$16 sm:$0x0] %v2616
  %2621 = vst [vmem:[%s2617] ss:$16 sm:$0x0] %v2616
  %v2638 = vlaneseq
  %v2639 = vshrl.u32 %v2638, 7
  %v2640 = vsub.s32 %v1308, %v2639
  %v2641 = vrot.slane %v1196, %v2640
  %v2642 = vlaneseq
  %v2643 = vshrl.u32 %v2642, 7
  %v2644 = vsub.s32 %v1313, %v2643
  %v2645 = vrot.slane %v1198, %v2644
  %v2646 = vsel %vm1318, %v2645, %v2641
  %v2647 = vlaneseq
  %v2648 = vshrl.u32 %v2647, 7
  %v2649 = vsub.s32 %v1320, %v2648
  %v2650 = vrot.slane %v1200, %v2649
  %v2651 = vsel %vm1325, %v2650, %v2646
  %v2652 = vlaneseq
  %v2653 = vshrl.u32 %v2652, 7
  %v2654 = vsub.s32 %v1327, %v2653
  %v2655 = vrot.slane %v1202, %v2654
  %v2656 = vsel %vm1332, %v2655, %v2651
  %v2657 = vlaneseq
  %v2658 = vshrl.u32 %v2657, 7
  %v2659 = vsub.s32 %v1334, %v2658
  %v2660 = vrot.slane %v1204, %v2659
  %v2661 = vsel %vm1339, %v2660, %v2656
  %v2662 = vlaneseq
  %v2663 = vshrl.u32 %v2662, 7
  %v2664 = vsub.s32 %v1341, %v2663
  %v2665 = vrot.slane %v1206, %v2664
  %v2666 = vsel %vm1346, %v2665, %v2661
  %v2667 = vlaneseq
  %v2668 = vshrl.u32 %v2667, 7
  %v2669 = vsub.s32 %v1348, %v2668
  %v2670 = vrot.slane %v1208, %v2669
  %v2671 = vsel %vm1353, %v2670, %v2666
  %v2672 = vlaneseq
  %v2673 = vshrl.u32 %v2672, 7
  %v2674 = vsub.s32 %v1355, %v2673
  %v2675 = vrot.slane %v1210, %v2674
  %v2676 = vsel %vm1360, %v2675, %v2671
  %v2677 = vlaneseq
  %v2678 = vshrl.u32 %v2677, 7
  %v2679 = vsub.s32 %v1362, %v2678
  %v2680 = vrot.slane %v1212, %v2679
  %v2681 = vsel %vm1367, %v2680, %v2676
  %v2682 = vlaneseq
  %v2683 = vshrl.u32 %v2682, 7
  %v2684 = vsub.s32 %v1369, %v2683
  %v2685 = vrot.slane %v1214, %v2684
  %v2686 = vsel %vm1374, %v2685, %v2681
  %v2687 = vlaneseq
  %v2688 = vshrl.u32 %v2687, 7
  %v2689 = vsub.s32 %v1376, %v2688
  %v2690 = vrot.slane %v1216, %v2689
  %v2691 = vsel %vm1381, %v2690, %v2686
  %v2692 = vlaneseq
  %v2693 = vshrl.u32 %v2692, 7
  %v2694 = vsub.s32 %v1383, %v2693
  %v2695 = vrot.slane %v1218, %v2694
  %v2696 = vsel %vm1388, %v2695, %v2691
  %v2697 = vlaneseq
  %v2698 = vshrl.u32 %v2697, 7
  %v2699 = vsub.s32 %v1390, %v2698
  %v2700 = vrot.slane %v1220, %v2699
  %v2701 = vsel %vm1395, %v2700, %v2696
  %v2702 = vlaneseq
  %v2703 = vshrl.u32 %v2702, 7
  %v2704 = vsub.s32 %v1397, %v2703
  %v2705 = vrot.slane %v1222, %v2704
  %v2706 = vsel %vm1402, %v2705, %v2701
  %v2707 = vlaneseq
  %v2708 = vshrl.u32 %v2707, 7
  %v2709 = vsub.s32 %v1404, %v2708
  %v2710 = vrot.slane %v1224, %v2709
  %v2711 = vsel %vm1409, %v2710, %v2706
  %v2712 = vlaneseq
  %v2713 = vshrl.u32 %v2712, 7
  %v2714 = vsub.s32 %v1411, %v2713
  %v2715 = vrot.slane %v1226, %v2714
  %v2716 = vsel %vm1416, %v2715, %v2711
  %s2717 = scalar_lea.vmem %s2, 13
  %2718 = vst [vmem:[%s2717] ss:$16 sm:$0x1] %v2716
  %2719 = vst [vmem:[%s2717] ss:$16 sm:$0x0] %v2716
  %2720 = vst [vmem:[%s2717] ss:$16 sm:$0x0] %v2716
  %2721 = vst [vmem:[%s2717] ss:$16 sm:$0x0] %v2716
  %v2738 = vlaneseq
  %v2739 = vshrl.u32 %v2738, 7
  %v2740 = vsub.s32 %v1308, %v2739
  %v2741 = vrot.slane %v1228, %v2740
  %v2742 = vlaneseq
  %v2743 = vshrl.u32 %v2742, 7
  %v2744 = vsub.s32 %v1313, %v2743
  %v2745 = vrot.slane %v1230, %v2744
  %v2746 = vsel %vm1318, %v2745, %v2741
  %v2747 = vlaneseq
  %v2748 = vshrl.u32 %v2747, 7
  %v2749 = vsub.s32 %v1320, %v2748
  %v2750 = vrot.slane %v1232, %v2749
  %v2751 = vsel %vm1325, %v2750, %v2746
  %v2752 = vlaneseq
  %v2753 = vshrl.u32 %v2752, 7
  %v2754 = vsub.s32 %v1327, %v2753
  %v2755 = vrot.slane %v1234, %v2754
  %v2756 = vsel %vm1332, %v2755, %v2751
  %v2757 = vlaneseq
  %v2758 = vshrl.u32 %v2757, 7
  %v2759 = vsub.s32 %v1334, %v2758
  %v2760 = vrot.slane %v1236, %v2759
  %v2761 = vsel %vm1339, %v2760, %v2756
  %v2762 = vlaneseq
  %v2763 = vshrl.u32 %v2762, 7
  %v2764 = vsub.s32 %v1341, %v2763
  %v2765 = vrot.slane %v1238, %v2764
  %v2766 = vsel %vm1346, %v2765, %v2761
  %v2767 = vlaneseq
  %v2768 = vshrl.u32 %v2767, 7
  %v2769 = vsub.s32 %v1348, %v2768
  %v2770 = vrot.slane %v1240, %v2769
  %v2771 = vsel %vm1353, %v2770, %v2766
  %v2772 = vlaneseq
  %v2773 = vshrl.u32 %v2772, 7
  %v2774 = vsub.s32 %v1355, %v2773
  %v2775 = vrot.slane %v1242, %v2774
  %v2776 = vsel %vm1360, %v2775, %v2771
  %v2777 = vlaneseq
  %v2778 = vshrl.u32 %v2777, 7
  %v2779 = vsub.s32 %v1362, %v2778
  %v2780 = vrot.slane %v1244, %v2779
  %v2781 = vsel %vm1367, %v2780, %v2776
  %v2782 = vlaneseq
  %v2783 = vshrl.u32 %v2782, 7
  %v2784 = vsub.s32 %v1369, %v2783
  %v2785 = vrot.slane %v1246, %v2784
  %v2786 = vsel %vm1374, %v2785, %v2781
  %v2787 = vlaneseq
  %v2788 = vshrl.u32 %v2787, 7
  %v2789 = vsub.s32 %v1376, %v2788
  %v2790 = vrot.slane %v1248, %v2789
  %v2791 = vsel %vm1381, %v2790, %v2786
  %v2792 = vlaneseq
  %v2793 = vshrl.u32 %v2792, 7
  %v2794 = vsub.s32 %v1383, %v2793
  %v2795 = vrot.slane %v1250, %v2794
  %v2796 = vsel %vm1388, %v2795, %v2791
  %v2797 = vlaneseq
  %v2798 = vshrl.u32 %v2797, 7
  %v2799 = vsub.s32 %v1390, %v2798
  %v2800 = vrot.slane %v1252, %v2799
  %v2801 = vsel %vm1395, %v2800, %v2796
  %v2802 = vlaneseq
  %v2803 = vshrl.u32 %v2802, 7
  %v2804 = vsub.s32 %v1397, %v2803
  %v2805 = vrot.slane %v1254, %v2804
  %v2806 = vsel %vm1402, %v2805, %v2801
  %v2807 = vlaneseq
  %v2808 = vshrl.u32 %v2807, 7
  %v2809 = vsub.s32 %v1404, %v2808
  %v2810 = vrot.slane %v1256, %v2809
  %v2811 = vsel %vm1409, %v2810, %v2806
  %v2812 = vlaneseq
  %v2813 = vshrl.u32 %v2812, 7
  %v2814 = vsub.s32 %v1411, %v2813
  %v2815 = vrot.slane %v1258, %v2814
  %v2816 = vsel %vm1416, %v2815, %v2811
  %s2817 = scalar_lea.vmem %s2, 14
  %2818 = vst [vmem:[%s2817] ss:$16 sm:$0x1] %v2816
  %2819 = vst [vmem:[%s2817] ss:$16 sm:$0x0] %v2816
  %2820 = vst [vmem:[%s2817] ss:$16 sm:$0x0] %v2816
  %2821 = vst [vmem:[%s2817] ss:$16 sm:$0x0] %v2816
  %v2838 = vlaneseq
  %v2839 = vshrl.u32 %v2838, 7
  %v2840 = vsub.s32 %v1308, %v2839
  %v2841 = vrot.slane %v1260, %v2840
  %v2842 = vlaneseq
  %v2843 = vshrl.u32 %v2842, 7
  %v2844 = vsub.s32 %v1313, %v2843
  %v2845 = vrot.slane %v1262, %v2844
  %v2846 = vsel %vm1318, %v2845, %v2841
  %v2847 = vlaneseq
  %v2848 = vshrl.u32 %v2847, 7
  %v2849 = vsub.s32 %v1320, %v2848
  %v2850 = vrot.slane %v1264, %v2849
  %v2851 = vsel %vm1325, %v2850, %v2846
  %v2852 = vlaneseq
  %v2853 = vshrl.u32 %v2852, 7
  %v2854 = vsub.s32 %v1327, %v2853
  %v2855 = vrot.slane %v1266, %v2854
  %v2856 = vsel %vm1332, %v2855, %v2851
  %v2857 = vlaneseq
  %v2858 = vshrl.u32 %v2857, 7
  %v2859 = vsub.s32 %v1334, %v2858
  %v2860 = vrot.slane %v1268, %v2859
  %v2861 = vsel %vm1339, %v2860, %v2856
  %v2862 = vlaneseq
  %v2863 = vshrl.u32 %v2862, 7
  %v2864 = vsub.s32 %v1341, %v2863
  %v2865 = vrot.slane %v1270, %v2864
  %v2866 = vsel %vm1346, %v2865, %v2861
  %v2867 = vlaneseq
  %v2868 = vshrl.u32 %v2867, 7
  %v2869 = vsub.s32 %v1348, %v2868
  %v2870 = vrot.slane %v1272, %v2869
  %v2871 = vsel %vm1353, %v2870, %v2866
  %v2872 = vlaneseq
  %v2873 = vshrl.u32 %v2872, 7
  %v2874 = vsub.s32 %v1355, %v2873
  %v2875 = vrot.slane %v1274, %v2874
  %v2876 = vsel %vm1360, %v2875, %v2871
  %v2877 = vlaneseq
  %v2878 = vshrl.u32 %v2877, 7
  %v2879 = vsub.s32 %v1362, %v2878
  %v2880 = vrot.slane %v1276, %v2879
  %v2881 = vsel %vm1367, %v2880, %v2876
  %v2882 = vlaneseq
  %v2883 = vshrl.u32 %v2882, 7
  %v2884 = vsub.s32 %v1369, %v2883
  %v2885 = vrot.slane %v1278, %v2884
  %v2886 = vsel %vm1374, %v2885, %v2881
  %v2887 = vlaneseq
  %v2888 = vshrl.u32 %v2887, 7
  %v2889 = vsub.s32 %v1376, %v2888
  %v2890 = vrot.slane %v1280, %v2889
  %v2891 = vsel %vm1381, %v2890, %v2886
  %v2892 = vlaneseq
  %v2893 = vshrl.u32 %v2892, 7
  %v2894 = vsub.s32 %v1383, %v2893
  %v2895 = vrot.slane %v1282, %v2894
  %v2896 = vsel %vm1388, %v2895, %v2891
  %v2897 = vlaneseq
  %v2898 = vshrl.u32 %v2897, 7
  %v2899 = vsub.s32 %v1390, %v2898
  %v2900 = vrot.slane %v1284, %v2899
  %v2901 = vsel %vm1395, %v2900, %v2896
  %v2902 = vlaneseq
  %v2903 = vshrl.u32 %v2902, 7
  %v2904 = vsub.s32 %v1397, %v2903
  %v2905 = vrot.slane %v1286, %v2904
  %v2906 = vsel %vm1402, %v2905, %v2901
  %v2907 = vlaneseq
  %v2908 = vshrl.u32 %v2907, 7
  %v2909 = vsub.s32 %v1404, %v2908
  %v2910 = vrot.slane %v1288, %v2909
  %v2911 = vsel %vm1409, %v2910, %v2906
  %v2912 = vlaneseq
  %v2913 = vshrl.u32 %v2912, 7
  %v2914 = vsub.s32 %v1411, %v2913
  %v2915 = vrot.slane %v1290, %v2914
  %v2916 = vsel %vm1416, %v2915, %v2911
  %s2917 = scalar_lea.vmem %s2, 15
  %2918 = vst [vmem:[%s2917] ss:$16 sm:$0x1] %v2916
  %2919 = vst [vmem:[%s2917] ss:$16 sm:$0x0] %v2916
  %2920 = vst [vmem:[%s2917] ss:$16 sm:$0x0] %v2916
  %2921 = vst [vmem:[%s2917] ss:$16 sm:$0x0] %v2916
  // Predicated region
  $region10: #{mf_forward.1} parent=0 // pred_check
    _
  $region11: #{mf_forward.1} parent=0 // pred_check_branch
    %2923 = sbr.rel (0) target = $region13
  $region12: #{mf_forward.1} parent=0 // pred_region
    _
  $region13: #{mf_forward.1} parent=0 // pred_fallthru
    _
  // Predicated region
  $region14: #{mf_forward.1} parent=0 // pred_check
    _
  $region15: #{mf_forward.1} parent=0 // pred_check_branch
    %2925 = sbr.rel (0) target = $region17
  $region16: #{mf_forward.1} parent=0 // pred_region
    _
  $region17: #{mf_forward.1} parent=0 // pred_fallthru
    _

</llo_original>
